<compile_context>
chip_gen: v5e
topology: v5e:2x2
jax: 0.10.0
libtpu: 0.0.40
codegen_flags: <defaults>
</compile_context>

<pallas_src>
import math

import jax
import jax.numpy as jnp
from jax.experimental import pallas as pl
from jax.experimental.pallas import tpu as pltpu

WINDOW = 20        # SparseAttention local window
SPARSITY = 0.1     # SparseAttention sparsity_ratio
NEG_BIG = -1e30    # additive-mask fill (finite → no -inf/NaN path)


# ----------------------------- Pallas kernel ---------------------------------

def _sparse_attention_kernel(q_ref, k_ref, v_ref, bias_ref, o_ref):
    """q/k/v: (B*H, S, Dh) f32 in VMEM; bias: (S, S) additive mask; o: (B*H, S, Dh)."""
    dh = q_ref.shape[-1]
    scale = 1.0 / math.sqrt(dh)

    # All B*H (batch, head) score matrices in one batched MXU pass.
    s = jnp.einsum('bqd,bkd->bqk', q_ref[...] * scale, k_ref[...],
                   preferred_element_type=jnp.float32)

    # Sparse mask as a single broadcasted add (0 for kept pairs, -1e30 for
    # pruned pairs).  Equivalent to torch's `scores*mask` + masked_fill(-inf):
    # kept entries are multiplied by 1.0, pruned entries get weight exactly 0.
    s = s + bias_ref[...]

    # Numerically-stable softmax with an exact divide (F.softmax parity).
    m = jnp.max(s, axis=-1, keepdims=True)
    p = jnp.exp(s - m)
    w = p / jnp.sum(p, axis=-1, keepdims=True)

    # nan_to_num is dead code: the mask diagonal guarantees every row has at
    # least one unmasked entry, so no row is all -1e30.

    o_ref[...] = jnp.einsum('bqk,bkd->bqd', w, v_ref[...],
                            preferred_element_type=jnp.float32)


# ----------------------------- wrapper ----------------------------------------

def sparse_attention(q, k, v, bias):
    """Pallas port of SparseAttention.forward (eval semantics).

    q, k, v: (B, H, S, Dh) float32.  bias: (S, S) additive mask from
    prepare_attention_bias().  Returns (B, H, S, Dh) float32.
    """
    B, H, S, Dh = q.shape
    # Fold (B, H) into one batch axis.  Leading-dim-only reshape: the last two
    # dims are untouched, so this is free and removes every per-head slice /
    # concatenate from the kernel body.
    qf = q.reshape(B * H, S, Dh)
    kf = k.reshape(B * H, S, Dh)
    vf = v.reshape(B * H, S, Dh)

    # TODO(synk): at the module's real buffer scale (max_genes up to 5000) the
    # fully-resident (S,S) bias and (B*H,S,S) scores exceed VMEM (v7x: 64 MiB);
    # re-tile with a grid over (q_tile, kv_tile) and BlockSpec-pipelined bias
    # tiles (plus pltpu.CompilerParams(vmem_limit_bytes=...)) before scaling S.
    out = pl.pallas_call(
        _sparse_attention_kernel,
        out_shape=jax.ShapeDtypeStruct((B * H, S, Dh), jnp.float32),
        in_specs=[pl.BlockSpec(memory_space=pltpu.MemorySpace.VMEM)] * 4,
        out_specs=pl.BlockSpec(memory_space=pltpu.MemorySpace.VMEM),
    )(qf, kf, vf, bias)
    return out.reshape(B, H, S, Dh)


# ----------------------------- mask buffer ------------------------------------

def build_sparse_mask(key, max_genes, window=WINDOW, sparsity=SPARSITY):
    """Port of SparseAttention.create_sparse_mask(): local window + random pairs
    + diagonal.
    TODO(synk): the random pairs come from jax.random, so the pattern is not
    bit-identical to a torch checkpoint's torch.randint-built buffer."""
    idx = jnp.arange(max_genes)
    mask = (jnp.abs(idx[:, None] - idx[None, :]) <= window // 2).astype(jnp.float32)
    n_random = int(sparsity * max_genes * max_genes)
    ki, kj = jax.random.split(key)
    ri = jax.random.randint(ki, (n_random,), 0, max_genes)
    rj = jax.random.randint(kj, (n_random,), 0, max_genes)
    mask = mask.at[ri, rj].set(1.0)
    return jnp.fill_diagonal(mask, 1.0, inplace=False)


def prepare_attention_bias(mask, seq_len):
    """One-time preprocessing of the registered mask buffer: slice to seq_len and
    convert {0,1} → additive bias {-1e30, 0} so the kernel does a single add."""
    max_genes = mask.shape[0]
    if seq_len <= max_genes:
        m = mask[:seq_len, :seq_len]
        return jnp.where(m > 0.0, 0.0, NEG_BIG).astype(jnp.float32)
    # torch applies no mask when seq_len > max_genes.
    return jnp.zeros((seq_len, seq_len), jnp.float32)


# ----------------------------- pure-JAX reference ------------------------------

def reference_sparse_attention(q, k, v, mask):
    """Direct transcription of the PyTorch forward (for validation)."""
    dh = q.shape[-1]
    scores = jnp.einsum('bhqd,bhkd->bhqk', q, k,
                        precision=jax.lax.Precision.HIGHEST)
    scores = scores / jnp.sqrt(jnp.float32(dh))
    scores = scores * mask
    scores = jnp.where(mask == 0.0, -jnp.inf, scores)
    w = jax.nn.softmax(scores, axis=-1)
    w = jnp.nan_to_num(w, nan=0.0)
    return jnp.einsum('bhqk,bhkd->bhqd', w, v,
                      precision=jax.lax.Precision.HIGHEST)


# ----------------------------- main --------------------------------------------

if __name__ == "__main__":
    B, H, S, Dh = 2, 4, 32, 8          # embed_dim = H*Dh = 32
    MAX_GENES = 64                     # mask buffer larger than seq_len, as in torch

    key = jax.random.PRNGKey(0)
    kq, kk, kv, km = jax.random.split(key, 4)
    q = jax.random.normal(kq, (B, H, S, Dh), jnp.float32)
    k = jax.random.normal(kk, (B, H, S, Dh), jnp.float32)
    v = jax.random.normal(kv, (B, H, S, Dh), jnp.float32)

    mask = build_sparse_mask(km, MAX_GENES)           # registered-buffer analogue
    bias = prepare_attention_bias(mask, S)            # one-time preprocessing

    fwd = jax.jit(sparse_attention)
    out = fwd(q, k, v, bias)
    jax.block_until_ready(out)
    assert out.shape == (B, H, S, Dh) and out.dtype == jnp.float32

    ref = reference_sparse_attention(q, k, v, mask[:S, :S])
    err = float(jnp.max(jnp.abs(out - ref)))
    assert err < 2e-2, f"max abs err vs reference: {err}"

    print("KERNEL_OK")
</pallas_src>

<mosaic_0001>
module attributes {stable_mosaic.version = 11 : i64} {
  func.func @_sparse_attention_kernel(%arg0: memref<8x32x8xf32, #tpu.memory_space<vmem>>, %arg1: memref<8x32x8xf32, #tpu.memory_space<vmem>>, %arg2: memref<8x32x8xf32, #tpu.memory_space<vmem>>, %arg3: memref<32x32xf32, #tpu.memory_space<vmem>>, %arg4: memref<8x32x8xf32, #tpu.memory_space<vmem>>) attributes {dimension_semantics = [], scalar_prefetch = 0 : i64, scratch_operands = 0 : i64, tpu.core_type = #tpu.core_type<tc>} {
    %c0 = arith.constant 0 : index
    %c0_0 = arith.constant 0 : index
    %c0_1 = arith.constant 0 : index
    %0 = vector.load %arg0[%c0, %c0_0, %c0_1] : memref<8x32x8xf32, #tpu.memory_space<vmem>>, vector<8x32x8xf32>
    %cst = arith.constant 0.353553385 : f32
    %1 = vector.broadcast %cst : f32 to vector<8x32x8xf32>
    %2 = arith.mulf %0, %1 : vector<8x32x8xf32>
    %c0_2 = arith.constant 0 : index
    %c0_3 = arith.constant 0 : index
    %c0_4 = arith.constant 0 : index
    %3 = vector.load %arg1[%c0_2, %c0_3, %c0_4] : memref<8x32x8xf32, #tpu.memory_space<vmem>>, vector<8x32x8xf32>
    "tpu.trace_start"() <{level = 10 : i32, message = "bqd,bkd->bqk"}> : () -> ()
    %cst_5 = arith.constant dense<0.000000e+00> : vector<8x32x32xf32>
    %4 = tpu.matmul %2, %3, %cst_5 {dimension_numbers = #tpu.dot_dimension_numbers<[2], [2], [1], [1], [0, 0, 0, 1, 1, 1], [0], [0]>} : vector<8x32x8xf32>, vector<8x32x8xf32>, vector<8x32x32xf32> -> vector<8x32x32xf32>
    "tpu.trace_stop"() : () -> ()
    %c0_6 = arith.constant 0 : index
    %c0_7 = arith.constant 0 : index
    %5 = vector.load %arg3[%c0_6, %c0_7] : memref<32x32xf32, #tpu.memory_space<vmem>>, vector<32x32xf32>
    %6 = vector.shape_cast %5 : vector<32x32xf32> to vector<1x32x32xf32>
    %7 = vector.broadcast %6 : vector<1x32x32xf32> to vector<8x32x32xf32>
    %8 = arith.addf %4, %7 : vector<8x32x32xf32>
    %cst_8 = arith.constant dense<0xFF800000> : vector<8x32xf32>
    %9 = vector.multi_reduction <maximumf>, %8, %cst_8 [2] : vector<8x32x32xf32> to vector<8x32xf32>
    %10 = vector.shape_cast %9 : vector<8x32xf32> to vector<8x32x1xf32>
    %11 = vector.broadcast %10 : vector<8x32x1xf32> to vector<8x32x32xf32>
    %12 = arith.subf %8, %11 : vector<8x32x32xf32>
    %13 = math.exp %12 : vector<8x32x32xf32>
    %cst_9 = arith.constant dense<0.000000e+00> : vector<8x32xf32>
    %14 = vector.multi_reduction <add>, %13, %cst_9 [2] : vector<8x32x32xf32> to vector<8x32xf32>
    %15 = vector.shape_cast %14 : vector<8x32xf32> to vector<8x32x1xf32>
    %16 = vector.broadcast %15 : vector<8x32x1xf32> to vector<8x32x32xf32>
    %17 = arith.divf %13, %16 : vector<8x32x32xf32>
    %c0_10 = arith.constant 0 : index
    %c0_11 = arith.constant 0 : index
    %c0_12 = arith.constant 0 : index
    %18 = vector.load %arg2[%c0_10, %c0_11, %c0_12] : memref<8x32x8xf32, #tpu.memory_space<vmem>>, vector<8x32x8xf32>
    "tpu.trace_start"() <{level = 10 : i32, message = "bqk,bkd->bqd"}> : () -> ()
    %cst_13 = arith.constant dense<0.000000e+00> : vector<8x32x8xf32>
    %19 = tpu.matmul %17, %18, %cst_13 {dimension_numbers = #tpu.dot_dimension_numbers<[2], [1], [1], [2], [0, 0, 0, 1, 1, 2], [0], [0]>} : vector<8x32x32xf32>, vector<8x32x8xf32>, vector<8x32x8xf32> -> vector<8x32x8xf32>
    "tpu.trace_stop"() : () -> ()
    %c0_14 = arith.constant 0 : index
    %c0_15 = arith.constant 0 : index
    %c0_16 = arith.constant 0 : index
    %20 = vector.load %arg4[%c0_14, %c0_15, %c0_16] : memref<8x32x8xf32, #tpu.memory_space<vmem>>, vector<8x32x8xf32>
    tpu.vector_store %arg4[%c0_14, %c0_15, %c0_16], %19 {strides = array<i32>} : memref<8x32x8xf32, #tpu.memory_space<vmem>>, vector<8x32x8xf32>,
    return
  }
}

</mosaic_0001>

<llo_original>
// kernel: sparse_attention.1
$region0: #{sparse_attention.1}
  #allocation0 [shape = 'u32[]', space=smem, size = 0x4, offset = 0x4, fixed_abs, tag = 'smem constant byte address 0x4 - core index']
  #allocation1 [shape = 'u32[72,128]{1,0:T(1,128)}', space=vmem, size = 0x9000, scoped, tag = 'internal scratch']
  %s0 = inlined_call_operand.vmem [shape: f32[8,32,8], index: 0, kind: input, shape index: {}]
  %s1 = inlined_call_operand.vmem [shape: f32[8,32,8], index: 1, kind: input, shape index: {}]
  %s2 = inlined_call_operand.vmem [shape: f32[8,32,8], index: 2, kind: input, shape index: {}]
  %s3 = inlined_call_operand.vmem [shape: f32[32,32], index: 3, kind: input, shape index: {}]
  %s4 = inlined_call_operand.vmem [shape: f32[8,32,8], index: 4, kind: output, shape index: {}]
  %s5 = sld [smem:[#allocation0]]
  $region26: #{sparse_attention.1} parent=0
    _
  %s7 = ssub.s32 1, %s5
  %s8 = scalar_select 0, %s7, %s5
  // Predicated region
  $region2: #{sparse_attention.1} parent=0 // pred_check
    _
  $region3: #{sparse_attention.1} parent=0 // pred_check_branch
    %10 = sbr.rel (0) target = $region5
  $region4: #{sparse_attention.1} parent=0 // pred_region
    _
  $region5: #{sparse_attention.1} parent=0 // pred_fallthru
    _
  // Predicated region
  $region6: #{sparse_attention.1} parent=0 // pred_check
    _
  $region7: #{sparse_attention.1} parent=0 // pred_check_branch
    %12 = sbr.rel (0) target = $region9
  $region8: #{sparse_attention.1} parent=0 // pred_region
    _
  $region9: #{sparse_attention.1} parent=0 // pred_fallthru
    _
  // Predicated region
  $region10: #{sparse_attention.1} parent=0 // pred_check
    _
  $region11: #{sparse_attention.1} parent=0 // pred_check_branch
    %14 = sbr.rel (0) target = $region13
  $region12: #{sparse_attention.1} parent=0 // pred_region
    _
  $region13: #{sparse_attention.1} parent=0 // pred_fallthru
    _
  // Predicated region
  $region14: #{sparse_attention.1} parent=0 // pred_check
    _
  $region15: #{sparse_attention.1} parent=0 // pred_check_branch
    %16 = sbr.rel (0) target = $region17
  $region16: #{sparse_attention.1} parent=0 // pred_region
    _
  $region17: #{sparse_attention.1} parent=0 // pred_fallthru
    _
  %v17 = vld [vmem:[%s0] sm:$0xff]
  %v18 = vld [vmem:[%s0 + $0x8] sm:$0xff]
  %v19 = vld [vmem:[%s0 + $0x10] sm:$0xff]
  %v20 = vld [vmem:[%s0 + $0x18] sm:$0xff]
  %v21 = vld [vmem:[%s0 + $0x20] sm:$0xff]
  %v22 = vld [vmem:[%s0 + $0x28] sm:$0xff]
  %v23 = vld [vmem:[%s0 + $0x30] sm:$0xff]
  %v24 = vld [vmem:[%s0 + $0x38] sm:$0xff]
  %v25 = vld [vmem:[%s0 + $0x40] sm:$0xff]
  %v26 = vld [vmem:[%s0 + $0x48] sm:$0xff]
  %v27 = vld [vmem:[%s0 + $0x50] sm:$0xff]
  %v28 = vld [vmem:[%s0 + $0x58] sm:$0xff]
  %v29 = vld [vmem:[%s0 + $0x60] sm:$0xff]
  %v30 = vld [vmem:[%s0 + $0x68] sm:$0xff]
  %v31 = vld [vmem:[%s0 + $0x70] sm:$0xff]
  %v32 = vld [vmem:[%s0 + $0x78] sm:$0xff]
  %v33 = vld [vmem:[%s0 + $0x80] sm:$0xff]
  %v34 = vld [vmem:[%s0 + $0x88] sm:$0xff]
  %v35 = vld [vmem:[%s0 + $0x90] sm:$0xff]
  %v36 = vld [vmem:[%s0 + $0x98] sm:$0xff]
  %v37 = vld [vmem:[%s0 + $0xa0] sm:$0xff]
  %v38 = vld [vmem:[%s0 + $0xa8] sm:$0xff]
  %v39 = vld [vmem:[%s0 + $0xb0] sm:$0xff]
  %v40 = vld [vmem:[%s0 + $0xb8] sm:$0xff]
  %v41 = vld [vmem:[%s0 + $0xc0] sm:$0xff]
  %v42 = vld [vmem:[%s0 + $0xc8] sm:$0xff]
  %v43 = vld [vmem:[%s0 + $0xd0] sm:$0xff]
  %v44 = vld [vmem:[%s0 + $0xd8] sm:$0xff]
  %v45 = vld [vmem:[%s0 + $0xe0] sm:$0xff]
  %v46 = vld [vmem:[%s0 + $0xe8] sm:$0xff]
  %v47 = vld [vmem:[%s0 + $0xf0] sm:$0xff]
  %v48 = vld [vmem:[%s0 + $0xf8] sm:$0xff]
  %v49 = vmul.f32 %v17, 0.35355338
  %v50 = vmul.f32 %v18, 0.35355338
  %v51 = vmul.f32 %v19, 0.35355338
  %v52 = vmul.f32 %v20, 0.35355338
  %v53 = vmul.f32 %v21, 0.35355338
  %v54 = vmul.f32 %v22, 0.35355338
  %v55 = vmul.f32 %v23, 0.35355338
  %v56 = vmul.f32 %v24, 0.35355338
  %v57 = vmul.f32 %v25, 0.35355338
  %v58 = vmul.f32 %v26, 0.35355338
  %v59 = vmul.f32 %v27, 0.35355338
  %v60 = vmul.f32 %v28, 0.35355338
  %v61 = vmul.f32 %v29, 0.35355338
  %v62 = vmul.f32 %v30, 0.35355338
  %v63 = vmul.f32 %v31, 0.35355338
  %v64 = vmul.f32 %v32, 0.35355338
  %v65 = vmul.f32 %v33, 0.35355338
  %v66 = vmul.f32 %v34, 0.35355338
  %v67 = vmul.f32 %v35, 0.35355338
  %v68 = vmul.f32 %v36, 0.35355338
  %v69 = vmul.f32 %v37, 0.35355338
  %v70 = vmul.f32 %v38, 0.35355338
  %v71 = vmul.f32 %v39, 0.35355338
  %v72 = vmul.f32 %v40, 0.35355338
  %v73 = vmul.f32 %v41, 0.35355338
  %v74 = vmul.f32 %v42, 0.35355338
  %v75 = vmul.f32 %v43, 0.35355338
  %v76 = vmul.f32 %v44, 0.35355338
  %v77 = vmul.f32 %v45, 0.35355338
  %v78 = vmul.f32 %v46, 0.35355338
  %v79 = vmul.f32 %v47, 0.35355338
  %v80 = vmul.f32 %v48, 0.35355338
  %v81 = vld [vmem:[%s1] sm:$0xff]
  %v82 = vld [vmem:[%s1 + $0x8] sm:$0xff]
  %v83 = vld [vmem:[%s1 + $0x10] sm:$0xff]
  %v84 = vld [vmem:[%s1 + $0x18] sm:$0xff]
  %v85 = vld [vmem:[%s1 + $0x20] sm:$0xff]
  %v86 = vld [vmem:[%s1 + $0x28] sm:$0xff]
  %v87 = vld [vmem:[%s1 + $0x30] sm:$0xff]
  %v88 = vld [vmem:[%s1 + $0x38] sm:$0xff]
  %v89 = vld [vmem:[%s1 + $0x40] sm:$0xff]
  %v90 = vld [vmem:[%s1 + $0x48] sm:$0xff]
  %v91 = vld [vmem:[%s1 + $0x50] sm:$0xff]
  %v92 = vld [vmem:[%s1 + $0x58] sm:$0xff]
  %v93 = vld [vmem:[%s1 + $0x60] sm:$0xff]
  %v94 = vld [vmem:[%s1 + $0x68] sm:$0xff]
  %v95 = vld [vmem:[%s1 + $0x70] sm:$0xff]
  %v96 = vld [vmem:[%s1 + $0x78] sm:$0xff]
  %v97 = vld [vmem:[%s1 + $0x80] sm:$0xff]
  %v98 = vld [vmem:[%s1 + $0x88] sm:$0xff]
  %v99 = vld [vmem:[%s1 + $0x90] sm:$0xff]
  %v100 = vld [vmem:[%s1 + $0x98] sm:$0xff]
  %v101 = vld [vmem:[%s1 + $0xa0] sm:$0xff]
  %v102 = vld [vmem:[%s1 + $0xa8] sm:$0xff]
  %v103 = vld [vmem:[%s1 + $0xb0] sm:$0xff]
  %v104 = vld [vmem:[%s1 + $0xb8] sm:$0xff]
  %v105 = vld [vmem:[%s1 + $0xc0] sm:$0xff]
  %v106 = vld [vmem:[%s1 + $0xc8] sm:$0xff]
  %v107 = vld [vmem:[%s1 + $0xd0] sm:$0xff]
  %v108 = vld [vmem:[%s1 + $0xd8] sm:$0xff]
  %v109 = vld [vmem:[%s1 + $0xe0] sm:$0xff]
  %v110 = vld [vmem:[%s1 + $0xe8] sm:$0xff]
  %v111 = vld [vmem:[%s1 + $0xf0] sm:$0xff]
  %v112 = vld [vmem:[%s1 + $0xf8] sm:$0xff]
  %v113 = vld [vmem:[%s3] sm:$0xff]
  %v114 = vld [vmem:[%s3 + $0x8] sm:$0xff]
  %v115 = vld [vmem:[%s3 + $0x10] sm:$0xff]
  %v116 = vld [vmem:[%s3 + $0x18] sm:$0xff]
  %vm117 = vcmask 64512
  %v119 = vsel %vm117, %v49, 0
  %v122 = vsel %vm117, %v50, 0
  %v125 = vsel %vm117, %v51, 0
  %v128 = vsel %vm117, %v52, 0
  %v131 = vsel %vm117, %v81, 0
  %v134 = vsel %vm117, %v82, 0
  %v137 = vsel %vm117, %v83, 0
  %v140 = vsel %vm117, %v84, 0
  %142 = vmatpush.xpose.msra.mxu0 0.0
  %143 = vmatpush.xpose.msra.mxu0 0.0
  %144 = vmatpush.xpose.msra.mxu0 0.0
  %145 = vmatpush.xpose.msra.mxu0 0.0
  %146 = vmatpush.xpose.msra.mxu0 0.0
  %147 = vmatpush.xpose.msra.mxu0 0.0
  %148 = vmatpush.xpose.msra.mxu0 0.0
  %149 = vmatpush.xpose.msra.mxu0 0.0
  %150 = vmatpush.xpose.msra.mxu0 0.0
  %151 = vmatpush.xpose.msra.mxu0 0.0
  %152 = vmatpush.xpose.msra.mxu0 0.0
  %153 = vmatpush.xpose.msra.mxu0 0.0
  %154 = vmatpush.xpose.msra.mxu0 %v140
  %155 = vmatpush.xpose.msra.mxu0 %v137
  %156 = vmatpush.xpose.msra.mxu0 %v134
  %157 = vmatpush.xpose.msra.mxu0 %v131
  %158 = vmatmul.f32.gmra.mxu0 %v119
  %v159 = vpop.f32.mrf.mxu0
  %v160 = vadd.f32 %v113, %v159
  %161 = vmatmul.f32.gmra.mxu0 %v122
  %v162 = vpop.f32.mrf.mxu0
  %v163 = vadd.f32 %v114, %v162
  %164 = vmatmul.f32.gmra.mxu0 %v125
  %v165 = vpop.f32.mrf.mxu0
  %v166 = vadd.f32 %v115, %v165
  %167 = vmatmul.f32.gmra.mxu0 %v128
  %v168 = vpop.f32.mrf.mxu0
  %v169 = vadd.f32 %v116, %v168
  %170 = vdwg.mxu0
  %v172 = vsel %vm117, %v53, 0
  %v175 = vsel %vm117, %v54, 0
  %v178 = vsel %vm117, %v55, 0
  %v181 = vsel %vm117, %v56, 0
  %v184 = vsel %vm117, %v85, 0
  %v187 = vsel %vm117, %v86, 0
  %v190 = vsel %vm117, %v87, 0
  %v193 = vsel %vm117, %v88, 0
  %195 = vmatpush.xpose.msra.mxu0 0.0
  %196 = vmatpush.xpose.msra.mxu0 0.0
  %197 = vmatpush.xpose.msra.mxu0 0.0
  %198 = vmatpush.xpose.msra.mxu0 0.0
  %199 = vmatpush.xpose.msra.mxu0 0.0
  %200 = vmatpush.xpose.msra.mxu0 0.0
  %201 = vmatpush.xpose.msra.mxu0 0.0
  %202 = vmatpush.xpose.msra.mxu0 0.0
  %203 = vmatpush.xpose.msra.mxu0 0.0
  %204 = vmatpush.xpose.msra.mxu0 0.0
  %205 = vmatpush.xpose.msra.mxu0 0.0
  %206 = vmatpush.xpose.msra.mxu0 0.0
  %207 = vmatpush.xpose.msra.mxu0 %v193
  %208 = vmatpush.xpose.msra.mxu0 %v190
  %209 = vmatpush.xpose.msra.mxu0 %v187
  %210 = vmatpush.xpose.msra.mxu0 %v184
  %211 = vmatmul.f32.gmra.mxu0 %v172
  %v212 = vpop.f32.mrf.mxu0
  %v213 = vadd.f32 %v113, %v212
  %214 = vmatmul.f32.gmra.mxu0 %v175
  %v215 = vpop.f32.mrf.mxu0
  %v216 = vadd.f32 %v114, %v215
  %217 = vmatmul.f32.gmra.mxu0 %v178
  %v218 = vpop.f32.mrf.mxu0
  %v219 = vadd.f32 %v115, %v218
  %220 = vmatmul.f32.gmra.mxu0 %v181
  %v221 = vpop.f32.mrf.mxu0
  %v222 = vadd.f32 %v116, %v221
  %223 = vdwg.mxu0
  %v225 = vsel %vm117, %v57, 0
  %v228 = vsel %vm117, %v58, 0
  %v231 = vsel %vm117, %v59, 0
  %v234 = vsel %vm117, %v60, 0
  %v237 = vsel %vm117, %v89, 0
  %v240 = vsel %vm117, %v90, 0
  %v243 = vsel %vm117, %v91, 0
  %v246 = vsel %vm117, %v92, 0
  %248 = vmatpush.xpose.msra.mxu0 0.0
  %249 = vmatpush.xpose.msra.mxu0 0.0
  %250 = vmatpush.xpose.msra.mxu0 0.0
  %251 = vmatpush.xpose.msra.mxu0 0.0
  %252 = vmatpush.xpose.msra.mxu0 0.0
  %253 = vmatpush.xpose.msra.mxu0 0.0
  %254 = vmatpush.xpose.msra.mxu0 0.0
  %255 = vmatpush.xpose.msra.mxu0 0.0
  %256 = vmatpush.xpose.msra.mxu0 0.0
  %257 = vmatpush.xpose.msra.mxu0 0.0
  %258 = vmatpush.xpose.msra.mxu0 0.0
  %259 = vmatpush.xpose.msra.mxu0 0.0
  %260 = vmatpush.xpose.msra.mxu0 %v246
  %261 = vmatpush.xpose.msra.mxu0 %v243
  %262 = vmatpush.xpose.msra.mxu0 %v240
  %263 = vmatpush.xpose.msra.mxu0 %v237
  %264 = vmatmul.f32.gmra.mxu0 %v225
  %v265 = vpop.f32.mrf.mxu0
  %v266 = vadd.f32 %v113, %v265
  %267 = vmatmul.f32.gmra.mxu0 %v228
  %v268 = vpop.f32.mrf.mxu0
  %v269 = vadd.f32 %v114, %v268
  %270 = vmatmul.f32.gmra.mxu0 %v231
  %v271 = vpop.f32.mrf.mxu0
  %v272 = vadd.f32 %v115, %v271
  %273 = vmatmul.f32.gmra.mxu0 %v234
  %v274 = vpop.f32.mrf.mxu0
  %v275 = vadd.f32 %v116, %v274
  %276 = vdwg.mxu0
  %v278 = vsel %vm117, %v61, 0
  %v281 = vsel %vm117, %v62, 0
  %v284 = vsel %vm117, %v63, 0
  %v287 = vsel %vm117, %v64, 0
  %v290 = vsel %vm117, %v93, 0
  %v293 = vsel %vm117, %v94, 0
  %v296 = vsel %vm117, %v95, 0
  %v299 = vsel %vm117, %v96, 0
  %301 = vmatpush.xpose.msra.mxu0 0.0
  %302 = vmatpush.xpose.msra.mxu0 0.0
  %303 = vmatpush.xpose.msra.mxu0 0.0
  %304 = vmatpush.xpose.msra.mxu0 0.0
  %305 = vmatpush.xpose.msra.mxu0 0.0
  %306 = vmatpush.xpose.msra.mxu0 0.0
  %307 = vmatpush.xpose.msra.mxu0 0.0
  %308 = vmatpush.xpose.msra.mxu0 0.0
  %309 = vmatpush.xpose.msra.mxu0 0.0
  %310 = vmatpush.xpose.msra.mxu0 0.0
  %311 = vmatpush.xpose.msra.mxu0 0.0
  %312 = vmatpush.xpose.msra.mxu0 0.0
  %313 = vmatpush.xpose.msra.mxu0 %v299
  %314 = vmatpush.xpose.msra.mxu0 %v296
  %315 = vmatpush.xpose.msra.mxu0 %v293
  %316 = vmatpush.xpose.msra.mxu0 %v290
  %317 = vmatmul.f32.gmra.mxu0 %v278
  %v318 = vpop.f32.mrf.mxu0
  %v319 = vadd.f32 %v113, %v318
  %320 = vmatmul.f32.gmra.mxu0 %v281
  %v321 = vpop.f32.mrf.mxu0
  %v322 = vadd.f32 %v114, %v321
  %323 = vmatmul.f32.gmra.mxu0 %v284
  %v324 = vpop.f32.mrf.mxu0
  %v325 = vadd.f32 %v115, %v324
  %326 = vmatmul.f32.gmra.mxu0 %v287
  %v327 = vpop.f32.mrf.mxu0
  %v328 = vadd.f32 %v116, %v327
  %329 = vdwg.mxu0
  %v331 = vsel %vm117, %v65, 0
  %v334 = vsel %vm117, %v66, 0
  %v337 = vsel %vm117, %v67, 0
  %v340 = vsel %vm117, %v68, 0
  %v343 = vsel %vm117, %v97, 0
  %v346 = vsel %vm117, %v98, 0
  %v349 = vsel %vm117, %v99, 0
  %v352 = vsel %vm117, %v100, 0
  %354 = vmatpush.xpose.msra.mxu0 0.0
  %355 = vmatpush.xpose.msra.mxu0 0.0
  %356 = vmatpush.xpose.msra.mxu0 0.0
  %357 = vmatpush.xpose.msra.mxu0 0.0
  %358 = vmatpush.xpose.msra.mxu0 0.0
  %359 = vmatpush.xpose.msra.mxu0 0.0
  %360 = vmatpush.xpose.msra.mxu0 0.0
  %361 = vmatpush.xpose.msra.mxu0 0.0
  %362 = vmatpush.xpose.msra.mxu0 0.0
  %363 = vmatpush.xpose.msra.mxu0 0.0
  %364 = vmatpush.xpose.msra.mxu0 0.0
  %365 = vmatpush.xpose.msra.mxu0 0.0
  %366 = vmatpush.xpose.msra.mxu0 %v352
  %367 = vmatpush.xpose.msra.mxu0 %v349
  %368 = vmatpush.xpose.msra.mxu0 %v346
  %369 = vmatpush.xpose.msra.mxu0 %v343
  %370 = vmatmul.f32.gmra.mxu0 %v331
  %v371 = vpop.f32.mrf.mxu0
  %v372 = vadd.f32 %v113, %v371
  %373 = vmatmul.f32.gmra.mxu0 %v334
  %v374 = vpop.f32.mrf.mxu0
  %v375 = vadd.f32 %v114, %v374
  %376 = vmatmul.f32.gmra.mxu0 %v337
  %v377 = vpop.f32.mrf.mxu0
  %v378 = vadd.f32 %v115, %v377
  %379 = vmatmul.f32.gmra.mxu0 %v340
  %v380 = vpop.f32.mrf.mxu0
  %v381 = vadd.f32 %v116, %v380
  %382 = vdwg.mxu0
  %v384 = vsel %vm117, %v69, 0
  %v387 = vsel %vm117, %v70, 0
  %v390 = vsel %vm117, %v71, 0
  %v393 = vsel %vm117, %v72, 0
  %v396 = vsel %vm117, %v101, 0
  %v399 = vsel %vm117, %v102, 0
  %v402 = vsel %vm117, %v103, 0
  %v405 = vsel %vm117, %v104, 0
  %407 = vmatpush.xpose.msra.mxu0 0.0
  %408 = vmatpush.xpose.msra.mxu0 0.0
  %409 = vmatpush.xpose.msra.mxu0 0.0
  %410 = vmatpush.xpose.msra.mxu0 0.0
  %411 = vmatpush.xpose.msra.mxu0 0.0
  %412 = vmatpush.xpose.msra.mxu0 0.0
  %413 = vmatpush.xpose.msra.mxu0 0.0
  %414 = vmatpush.xpose.msra.mxu0 0.0
  %415 = vmatpush.xpose.msra.mxu0 0.0
  %416 = vmatpush.xpose.msra.mxu0 0.0
  %417 = vmatpush.xpose.msra.mxu0 0.0
  %418 = vmatpush.xpose.msra.mxu0 0.0
  %419 = vmatpush.xpose.msra.mxu0 %v405
  %420 = vmatpush.xpose.msra.mxu0 %v402
  %421 = vmatpush.xpose.msra.mxu0 %v399
  %422 = vmatpush.xpose.msra.mxu0 %v396
  %423 = vmatmul.f32.gmra.mxu0 %v384
  %v424 = vpop.f32.mrf.mxu0
  %v425 = vadd.f32 %v113, %v424
  %426 = vmatmul.f32.gmra.mxu0 %v387
  %v427 = vpop.f32.mrf.mxu0
  %v428 = vadd.f32 %v114, %v427
  %429 = vmatmul.f32.gmra.mxu0 %v390
  %v430 = vpop.f32.mrf.mxu0
  %v431 = vadd.f32 %v115, %v430
  %432 = vmatmul.f32.gmra.mxu0 %v393
  %v433 = vpop.f32.mrf.mxu0
  %v434 = vadd.f32 %v116, %v433
  %435 = vdwg.mxu0
  %v437 = vsel %vm117, %v73, 0
  %v440 = vsel %vm117, %v74, 0
  %v443 = vsel %vm117, %v75, 0
  %v446 = vsel %vm117, %v76, 0
  %v449 = vsel %vm117, %v105, 0
  %v452 = vsel %vm117, %v106, 0
  %v455 = vsel %vm117, %v107, 0
  %v458 = vsel %vm117, %v108, 0
  %460 = vmatpush.xpose.msra.mxu0 0.0
  %461 = vmatpush.xpose.msra.mxu0 0.0
  %462 = vmatpush.xpose.msra.mxu0 0.0
  %463 = vmatpush.xpose.msra.mxu0 0.0
  %464 = vmatpush.xpose.msra.mxu0 0.0
  %465 = vmatpush.xpose.msra.mxu0 0.0
  %466 = vmatpush.xpose.msra.mxu0 0.0
  %467 = vmatpush.xpose.msra.mxu0 0.0
  %468 = vmatpush.xpose.msra.mxu0 0.0
  %469 = vmatpush.xpose.msra.mxu0 0.0
  %470 = vmatpush.xpose.msra.mxu0 0.0
  %471 = vmatpush.xpose.msra.mxu0 0.0
  %472 = vmatpush.xpose.msra.mxu0 %v458
  %473 = vmatpush.xpose.msra.mxu0 %v455
  %474 = vmatpush.xpose.msra.mxu0 %v452
  %475 = vmatpush.xpose.msra.mxu0 %v449
  %476 = vmatmul.f32.gmra.mxu0 %v437
  %v477 = vpop.f32.mrf.mxu0
  %v478 = vadd.f32 %v113, %v477
  %479 = vmatmul.f32.gmra.mxu0 %v440
  %v480 = vpop.f32.mrf.mxu0
  %v481 = vadd.f32 %v114, %v480
  %482 = vmatmul.f32.gmra.mxu0 %v443
  %v483 = vpop.f32.mrf.mxu0
  %v484 = vadd.f32 %v115, %v483
  %485 = vmatmul.f32.gmra.mxu0 %v446
  %v486 = vpop.f32.mrf.mxu0
  %v487 = vadd.f32 %v116, %v486
  %488 = vdwg.mxu0
  %v490 = vsel %vm117, %v77, 0
  %v493 = vsel %vm117, %v78, 0
  %v496 = vsel %vm117, %v79, 0
  %v499 = vsel %vm117, %v80, 0
  %v502 = vsel %vm117, %v109, 0
  %v505 = vsel %vm117, %v110, 0
  %v508 = vsel %vm117, %v111, 0
  %v511 = vsel %vm117, %v112, 0
  %513 = vmatpush.xpose.msra.mxu0 0.0
  %514 = vmatpush.xpose.msra.mxu0 0.0
  %515 = vmatpush.xpose.msra.mxu0 0.0
  %516 = vmatpush.xpose.msra.mxu0 0.0
  %517 = vmatpush.xpose.msra.mxu0 0.0
  %518 = vmatpush.xpose.msra.mxu0 0.0
  %519 = vmatpush.xpose.msra.mxu0 0.0
  %520 = vmatpush.xpose.msra.mxu0 0.0
  %521 = vmatpush.xpose.msra.mxu0 0.0
  %522 = vmatpush.xpose.msra.mxu0 0.0
  %523 = vmatpush.xpose.msra.mxu0 0.0
  %524 = vmatpush.xpose.msra.mxu0 0.0
  %525 = vmatpush.xpose.msra.mxu0 %v511
  %526 = vmatpush.xpose.msra.mxu0 %v508
  %527 = vmatpush.xpose.msra.mxu0 %v505
  %528 = vmatpush.xpose.msra.mxu0 %v502
  %529 = vmatmul.f32.gmra.mxu0 %v490
  %v530 = vpop.f32.mrf.mxu0
  %v531 = vadd.f32 %v113, %v530
  %532 = vmatmul.f32.gmra.mxu0 %v493
  %v533 = vpop.f32.mrf.mxu0
  %v534 = vadd.f32 %v114, %v533
  %535 = vmatmul.f32.gmra.mxu0 %v496
  %v536 = vpop.f32.mrf.mxu0
  %v537 = vadd.f32 %v115, %v536
  %538 = vmatmul.f32.gmra.mxu0 %v499
  %v539 = vpop.f32.mrf.mxu0
  %v540 = vadd.f32 %v116, %v539
  %541 = vdwg.mxu0
  %vm542 = vcmask 261120
  %v543 = vsel %vm542, %v160, -inf
  %544 = vmax.xlane.f32.xlu0 %v543
  %v545 = vpop.xlane.xlu0 %544
  %v546 = vsel %vm542, %v163, -inf
  %547 = vmax.xlane.f32.xlu0 %v546
  %v548 = vpop.xlane.xlu0 %547
  %v549 = vsel %vm542, %v166, -inf
  %550 = vmax.xlane.f32.xlu0 %v549
  %v551 = vpop.xlane.xlu0 %550
  %v552 = vsel %vm542, %v169, -inf
  %553 = vmax.xlane.f32.xlu0 %v552
  %v554 = vpop.xlane.xlu0 %553
  %v555 = vsel %vm542, %v213, -inf
  %556 = vmax.xlane.f32.xlu0 %v555
  %v557 = vpop.xlane.xlu0 %556
  %v558 = vsel %vm542, %v216, -inf
  %559 = vmax.xlane.f32.xlu0 %v558
  %v560 = vpop.xlane.xlu0 %559
  %v561 = vsel %vm542, %v219, -inf
  %562 = vmax.xlane.f32.xlu0 %v561
  %v563 = vpop.xlane.xlu0 %562
  %v564 = vsel %vm542, %v222, -inf
  %565 = vmax.xlane.f32.xlu0 %v564
  %v566 = vpop.xlane.xlu0 %565
  %v567 = vsel %vm542, %v266, -inf
  %568 = vmax.xlane.f32.xlu0 %v567
  %v569 = vpop.xlane.xlu0 %568
  %v570 = vsel %vm542, %v269, -inf
  %571 = vmax.xlane.f32.xlu0 %v570
  %v572 = vpop.xlane.xlu0 %571
  %v573 = vsel %vm542, %v272, -inf
  %574 = vmax.xlane.f32.xlu0 %v573
  %v575 = vpop.xlane.xlu0 %574
  %v576 = vsel %vm542, %v275, -inf
  %577 = vmax.xlane.f32.xlu0 %v576
  %v578 = vpop.xlane.xlu0 %577
  %v579 = vsel %vm542, %v319, -inf
  %580 = vmax.xlane.f32.xlu0 %v579
  %v581 = vpop.xlane.xlu0 %580
  %v582 = vsel %vm542, %v322, -inf
  %583 = vmax.xlane.f32.xlu0 %v582
  %v584 = vpop.xlane.xlu0 %583
  %v585 = vsel %vm542, %v325, -inf
  %586 = vmax.xlane.f32.xlu0 %v585
  %v587 = vpop.xlane.xlu0 %586
  %v588 = vsel %vm542, %v328, -inf
  %589 = vmax.xlane.f32.xlu0 %v588
  %v590 = vpop.xlane.xlu0 %589
  %v591 = vsel %vm542, %v372, -inf
  %592 = vmax.xlane.f32.xlu0 %v591
  %v593 = vpop.xlane.xlu0 %592
  %v594 = vsel %vm542, %v375, -inf
  %595 = vmax.xlane.f32.xlu0 %v594
  %v596 = vpop.xlane.xlu0 %595
  %v597 = vsel %vm542, %v378, -inf
  %598 = vmax.xlane.f32.xlu0 %v597
  %v599 = vpop.xlane.xlu0 %598
  %v600 = vsel %vm542, %v381, -inf
  %601 = vmax.xlane.f32.xlu0 %v600
  %v602 = vpop.xlane.xlu0 %601
  %v603 = vsel %vm542, %v425, -inf
  %604 = vmax.xlane.f32.xlu0 %v603
  %v605 = vpop.xlane.xlu0 %604
  %v606 = vsel %vm542, %v428, -inf
  %607 = vmax.xlane.f32.xlu0 %v606
  %v608 = vpop.xlane.xlu0 %607
  %v609 = vsel %vm542, %v431, -inf
  %610 = vmax.xlane.f32.xlu0 %v609
  %v611 = vpop.xlane.xlu0 %610
  %v612 = vsel %vm542, %v434, -inf
  %613 = vmax.xlane.f32.xlu0 %v612
  %v614 = vpop.xlane.xlu0 %613
  %v615 = vsel %vm542, %v478, -inf
  %616 = vmax.xlane.f32.xlu0 %v615
  %v617 = vpop.xlane.xlu0 %616
  %v618 = vsel %vm542, %v481, -inf
  %619 = vmax.xlane.f32.xlu0 %v618
  %v620 = vpop.xlane.xlu0 %619
  %v621 = vsel %vm542, %v484, -inf
  %622 = vmax.xlane.f32.xlu0 %v621
  %v623 = vpop.xlane.xlu0 %622
  %v624 = vsel %vm542, %v487, -inf
  %625 = vmax.xlane.f32.xlu0 %v624
  %v626 = vpop.xlane.xlu0 %625
  %v627 = vsel %vm542, %v531, -inf
  %628 = vmax.xlane.f32.xlu0 %v627
  %v629 = vpop.xlane.xlu0 %628
  %v630 = vsel %vm542, %v534, -inf
  %631 = vmax.xlane.f32.xlu0 %v630
  %v632 = vpop.xlane.xlu0 %631
  %v633 = vsel %vm542, %v537, -inf
  %634 = vmax.xlane.f32.xlu0 %v633
  %v635 = vpop.xlane.xlu0 %634
  %v636 = vsel %vm542, %v540, -inf
  %637 = vmax.xlane.f32.xlu0 %v636
  %v638 = vpop.xlane.xlu0 %637
  %v639 = vsub.f32 %v160, %v545
  %v640 = vsub.f32 %v163, %v548
  %v641 = vsub.f32 %v166, %v551
  %v642 = vsub.f32 %v169, %v554
  %v643 = vsub.f32 %v213, %v557
  %v644 = vsub.f32 %v216, %v560
  %v645 = vsub.f32 %v219, %v563
  %v646 = vsub.f32 %v222, %v566
  %v647 = vsub.f32 %v266, %v569
  %v648 = vsub.f32 %v269, %v572
  %v649 = vsub.f32 %v272, %v575
  %v650 = vsub.f32 %v275, %v578
  %v651 = vsub.f32 %v319, %v581
  %v652 = vsub.f32 %v322, %v584
  %v653 = vsub.f32 %v325, %v587
  %v654 = vsub.f32 %v328, %v590
  %v655 = vsub.f32 %v372, %v593
  %v656 = vsub.f32 %v375, %v596
  %v657 = vsub.f32 %v378, %v599
  %v658 = vsub.f32 %v381, %v602
  %v659 = vsub.f32 %v425, %v605
  %v660 = vsub.f32 %v428, %v608
  %v661 = vsub.f32 %v431, %v611
  %v662 = vsub.f32 %v434, %v614
  %v663 = vsub.f32 %v478, %v617
  %v664 = vsub.f32 %v481, %v620
  %v665 = vsub.f32 %v484, %v623
  %v666 = vsub.f32 %v487, %v626
  %v667 = vsub.f32 %v531, %v629
  %v668 = vsub.f32 %v534, %v632
  %v669 = vsub.f32 %v537, %v635
  %v670 = vsub.f32 %v540, %v638
  %v671 = vmul.f32 %v639, 1.442695
  %v672 = vpow.pop %v671
  %v673 = vmul.f32 %v640, 1.442695
  %v674 = vpow.pop %v673
  %v675 = vmul.f32 %v641, 1.442695
  %v676 = vpow.pop %v675
  %v677 = vmul.f32 %v642, 1.442695
  %v678 = vpow.pop %v677
  %v679 = vmul.f32 %v643, 1.442695
  %v680 = vpow.pop %v679
  %v681 = vmul.f32 %v644, 1.442695
  %v682 = vpow.pop %v681
  %v683 = vmul.f32 %v645, 1.442695
  %v684 = vpow.pop %v683
  %v685 = vmul.f32 %v646, 1.442695
  %v686 = vpow.pop %v685
  %v687 = vmul.f32 %v647, 1.442695
  %v688 = vpow.pop %v687
  %v689 = vmul.f32 %v648, 1.442695
  %v690 = vpow.pop %v689
  %v691 = vmul.f32 %v649, 1.442695
  %v692 = vpow.pop %v691
  %v693 = vmul.f32 %v650, 1.442695
  %v694 = vpow.pop %v693
  %v695 = vmul.f32 %v651, 1.442695
  %v696 = vpow.pop %v695
  %v697 = vmul.f32 %v652, 1.442695
  %v698 = vpow.pop %v697
  %v699 = vmul.f32 %v653, 1.442695
  %v700 = vpow.pop %v699
  %v701 = vmul.f32 %v654, 1.442695
  %v702 = vpow.pop %v701
  %v703 = vmul.f32 %v655, 1.442695
  %v704 = vpow.pop %v703
  %v705 = vmul.f32 %v656, 1.442695
  %v706 = vpow.pop %v705
  %v707 = vmul.f32 %v657, 1.442695
  %v708 = vpow.pop %v707
  %v709 = vmul.f32 %v658, 1.442695
  %v710 = vpow.pop %v709
  %v711 = vmul.f32 %v659, 1.442695
  %v712 = vpow.pop %v711
  %v713 = vmul.f32 %v660, 1.442695
  %v714 = vpow.pop %v713
  %v715 = vmul.f32 %v661, 1.442695
  %v716 = vpow.pop %v715
  %v717 = vmul.f32 %v662, 1.442695
  %v718 = vpow.pop %v717
  %v719 = vmul.f32 %v663, 1.442695
  %v720 = vpow.pop %v719
  %v721 = vmul.f32 %v664, 1.442695
  %v722 = vpow.pop %v721
  %v723 = vmul.f32 %v665, 1.442695
  %v724 = vpow.pop %v723
  %v725 = vmul.f32 %v666, 1.442695
  %v726 = vpow.pop %v725
  %v727 = vmul.f32 %v667, 1.442695
  %v728 = vpow.pop %v727
  %v729 = vmul.f32 %v668, 1.442695
  %v730 = vpow.pop %v729
  %v731 = vmul.f32 %v669, 1.442695
  %v732 = vpow.pop %v731
  %v733 = vmul.f32 %v670, 1.442695
  %v734 = vpow.pop %v733
  %v735 = vsel %vm542, %v672, 0.0
  %736 = vadd.xlane.f32.xlu0 %v735
  %v737 = vpop.xlane.xlu0 %736
  %v738 = vsel %vm542, %v674, 0.0
  %739 = vadd.xlane.f32.xlu0 %v738
  %v740 = vpop.xlane.xlu0 %739
  %v741 = vsel %vm542, %v676, 0.0
  %742 = vadd.xlane.f32.xlu0 %v741
  %v743 = vpop.xlane.xlu0 %742
  %v744 = vsel %vm542, %v678, 0.0
  %745 = vadd.xlane.f32.xlu0 %v744
  %v746 = vpop.xlane.xlu0 %745
  %v747 = vsel %vm542, %v680, 0.0
  %748 = vadd.xlane.f32.xlu0 %v747
  %v749 = vpop.xlane.xlu0 %748
  %v750 = vsel %vm542, %v682, 0.0
  %751 = vadd.xlane.f32.xlu0 %v750
  %v752 = vpop.xlane.xlu0 %751
  %v753 = vsel %vm542, %v684, 0.0
  %754 = vadd.xlane.f32.xlu0 %v753
  %v755 = vpop.xlane.xlu0 %754
  %v756 = vsel %vm542, %v686, 0.0
  %757 = vadd.xlane.f32.xlu0 %v756
  %v758 = vpop.xlane.xlu0 %757
  %v759 = vsel %vm542, %v688, 0.0
  %760 = vadd.xlane.f32.xlu0 %v759
  %v761 = vpop.xlane.xlu0 %760
  %v762 = vsel %vm542, %v690, 0.0
  %763 = vadd.xlane.f32.xlu0 %v762
  %v764 = vpop.xlane.xlu0 %763
  %v765 = vsel %vm542, %v692, 0.0
  %766 = vadd.xlane.f32.xlu0 %v765
  %v767 = vpop.xlane.xlu0 %766
  %v768 = vsel %vm542, %v694, 0.0
  %769 = vadd.xlane.f32.xlu0 %v768
  %v770 = vpop.xlane.xlu0 %769
  %v771 = vsel %vm542, %v696, 0.0
  %772 = vadd.xlane.f32.xlu0 %v771
  %v773 = vpop.xlane.xlu0 %772
  %v774 = vsel %vm542, %v698, 0.0
  %775 = vadd.xlane.f32.xlu0 %v774
  %v776 = vpop.xlane.xlu0 %775
  %v777 = vsel %vm542, %v700, 0.0
  %778 = vadd.xlane.f32.xlu0 %v777
  %v779 = vpop.xlane.xlu0 %778
  %v780 = vsel %vm542, %v702, 0.0
  %781 = vadd.xlane.f32.xlu0 %v780
  %v782 = vpop.xlane.xlu0 %781
  %v783 = vsel %vm542, %v704, 0.0
  %784 = vadd.xlane.f32.xlu0 %v783
  %v785 = vpop.xlane.xlu0 %784
  %v786 = vsel %vm542, %v706, 0.0
  %787 = vadd.xlane.f32.xlu0 %v786
  %v788 = vpop.xlane.xlu0 %787
  %v789 = vsel %vm542, %v708, 0.0
  %790 = vadd.xlane.f32.xlu0 %v789
  %v791 = vpop.xlane.xlu0 %790
  %v792 = vsel %vm542, %v710, 0.0
  %793 = vadd.xlane.f32.xlu0 %v792
  %v794 = vpop.xlane.xlu0 %793
  %v795 = vsel %vm542, %v712, 0.0
  %796 = vadd.xlane.f32.xlu0 %v795
  %v797 = vpop.xlane.xlu0 %796
  %v798 = vsel %vm542, %v714, 0.0
  %799 = vadd.xlane.f32.xlu0 %v798
  %v800 = vpop.xlane.xlu0 %799
  %v801 = vsel %vm542, %v716, 0.0
  %802 = vadd.xlane.f32.xlu0 %v801
  %v803 = vpop.xlane.xlu0 %802
  %v804 = vsel %vm542, %v718, 0.0
  %805 = vadd.xlane.f32.xlu0 %v804
  %v806 = vpop.xlane.xlu0 %805
  %v807 = vsel %vm542, %v720, 0.0
  %808 = vadd.xlane.f32.xlu0 %v807
  %v809 = vpop.xlane.xlu0 %808
  %v810 = vsel %vm542, %v722, 0.0
  %811 = vadd.xlane.f32.xlu0 %v810
  %v812 = vpop.xlane.xlu0 %811
  %v813 = vsel %vm542, %v724, 0.0
  %814 = vadd.xlane.f32.xlu0 %v813
  %v815 = vpop.xlane.xlu0 %814
  %v816 = vsel %vm542, %v726, 0.0
  %817 = vadd.xlane.f32.xlu0 %v816
  %v818 = vpop.xlane.xlu0 %817
  %v819 = vsel %vm542, %v728, 0.0
  %820 = vadd.xlane.f32.xlu0 %v819
  %v821 = vpop.xlane.xlu0 %820
  %v822 = vsel %vm542, %v730, 0.0
  %823 = vadd.xlane.f32.xlu0 %v822
  %v824 = vpop.xlane.xlu0 %823
  %v825 = vsel %vm542, %v732, 0.0
  %826 = vadd.xlane.f32.xlu0 %v825
  %v827 = vpop.xlane.xlu0 %826
  %v828 = vsel %vm542, %v734, 0.0
  %829 = vadd.xlane.f32.xlu0 %v828
  %v830 = vpop.xlane.xlu0 %829
  %v831 = vrcp.pop %v737
  %v832 = vmul.f32 %v737, %v831
  %v833 = vsub.f32 1.0, %v832
  %v834 = vmul.f32 %v831, %v833
  %v835 = vadd.f32 %v831, %v834
  %vm836 = vweird.f32 %v737
  %vm837 = vweird.f32 %v831
  %vm838 = vmor %vm836, %vm837
  %v839 = vsel %vm838, %v831, %v835
  %v840 = vand.u32 2147483647, %v737
  %vm841 = vcmp.eq.f32.partialorder %v840, 8.507059e+37
  %v842 = vand.u32 %v737, 2147483648
  %v843 = vor.u32 1.1754944e-38, %v842
  %v844 = vsel %vm841, %v843, %v839
  %v845 = vmul.f32 %v672, %v844
  %v846 = vrcp.pop %v740
  %v847 = vmul.f32 %v740, %v846
  %v848 = vsub.f32 1.0, %v847
  %v849 = vmul.f32 %v846, %v848
  %v850 = vadd.f32 %v846, %v849
  %vm851 = vweird.f32 %v740
  %vm852 = vweird.f32 %v846
  %vm853 = vmor %vm851, %vm852
  %v854 = vsel %vm853, %v846, %v850
  %v855 = vand.u32 2147483647, %v740
  %vm856 = vcmp.eq.f32.partialorder %v855, 8.507059e+37
  %v857 = vand.u32 %v740, 2147483648
  %v858 = vor.u32 1.1754944e-38, %v857
  %v859 = vsel %vm856, %v858, %v854
  %v860 = vmul.f32 %v674, %v859
  %v861 = vrcp.pop %v743
  %v862 = vmul.f32 %v743, %v861
  %v863 = vsub.f32 1.0, %v862
  %v864 = vmul.f32 %v861, %v863
  %v865 = vadd.f32 %v861, %v864
  %vm866 = vweird.f32 %v743
  %vm867 = vweird.f32 %v861
  %vm868 = vmor %vm866, %vm867
  %v869 = vsel %vm868, %v861, %v865
  %v870 = vand.u32 2147483647, %v743
  %vm871 = vcmp.eq.f32.partialorder %v870, 8.507059e+37
  %v872 = vand.u32 %v743, 2147483648
  %v873 = vor.u32 1.1754944e-38, %v872
  %v874 = vsel %vm871, %v873, %v869
  %v875 = vmul.f32 %v676, %v874
  %v876 = vrcp.pop %v746
  %v877 = vmul.f32 %v746, %v876
  %v878 = vsub.f32 1.0, %v877
  %v879 = vmul.f32 %v876, %v878
  %v880 = vadd.f32 %v876, %v879
  %vm881 = vweird.f32 %v746
  %vm882 = vweird.f32 %v876
  %vm883 = vmor %vm881, %vm882
  %v884 = vsel %vm883, %v876, %v880
  %v885 = vand.u32 2147483647, %v746
  %vm886 = vcmp.eq.f32.partialorder %v885, 8.507059e+37
  %v887 = vand.u32 %v746, 2147483648
  %v888 = vor.u32 1.1754944e-38, %v887
  %v889 = vsel %vm886, %v888, %v884
  %v890 = vmul.f32 %v678, %v889
  %v891 = vrcp.pop %v749
  %v892 = vmul.f32 %v749, %v891
  %v893 = vsub.f32 1.0, %v892
  %v894 = vmul.f32 %v891, %v893
  %v895 = vadd.f32 %v891, %v894
  %vm896 = vweird.f32 %v749
  %vm897 = vweird.f32 %v891
  %vm898 = vmor %vm896, %vm897
  %v899 = vsel %vm898, %v891, %v895
  %v900 = vand.u32 2147483647, %v749
  %vm901 = vcmp.eq.f32.partialorder %v900, 8.507059e+37
  %v902 = vand.u32 %v749, 2147483648
  %v903 = vor.u32 1.1754944e-38, %v902
  %v904 = vsel %vm901, %v903, %v899
  %v905 = vmul.f32 %v680, %v904
  %v906 = vrcp.pop %v752
  %v907 = vmul.f32 %v752, %v906
  %v908 = vsub.f32 1.0, %v907
  %v909 = vmul.f32 %v906, %v908
  %v910 = vadd.f32 %v906, %v909
  %vm911 = vweird.f32 %v752
  %vm912 = vweird.f32 %v906
  %vm913 = vmor %vm911, %vm912
  %v914 = vsel %vm913, %v906, %v910
  %v915 = vand.u32 2147483647, %v752
  %vm916 = vcmp.eq.f32.partialorder %v915, 8.507059e+37
  %v917 = vand.u32 %v752, 2147483648
  %v918 = vor.u32 1.1754944e-38, %v917
  %v919 = vsel %vm916, %v918, %v914
  %v920 = vmul.f32 %v682, %v919
  %v921 = vrcp.pop %v755
  %v922 = vmul.f32 %v755, %v921
  %v923 = vsub.f32 1.0, %v922
  %v924 = vmul.f32 %v921, %v923
  %v925 = vadd.f32 %v921, %v924
  %vm926 = vweird.f32 %v755
  %vm927 = vweird.f32 %v921
  %vm928 = vmor %vm926, %vm927
  %v929 = vsel %vm928, %v921, %v925
  %v930 = vand.u32 2147483647, %v755
  %vm931 = vcmp.eq.f32.partialorder %v930, 8.507059e+37
  %v932 = vand.u32 %v755, 2147483648
  %v933 = vor.u32 1.1754944e-38, %v932
  %v934 = vsel %vm931, %v933, %v929
  %v935 = vmul.f32 %v684, %v934
  %v936 = vrcp.pop %v758
  %v937 = vmul.f32 %v758, %v936
  %v938 = vsub.f32 1.0, %v937
  %v939 = vmul.f32 %v936, %v938
  %v940 = vadd.f32 %v936, %v939
  %vm941 = vweird.f32 %v758
  %vm942 = vweird.f32 %v936
  %vm943 = vmor %vm941, %vm942
  %v944 = vsel %vm943, %v936, %v940
  %v945 = vand.u32 2147483647, %v758
  %vm946 = vcmp.eq.f32.partialorder %v945, 8.507059e+37
  %v947 = vand.u32 %v758, 2147483648
  %v948 = vor.u32 1.1754944e-38, %v947
  %v949 = vsel %vm946, %v948, %v944
  %v950 = vmul.f32 %v686, %v949
  %v951 = vrcp.pop %v761
  %v952 = vmul.f32 %v761, %v951
  %v953 = vsub.f32 1.0, %v952
  %v954 = vmul.f32 %v951, %v953
  %v955 = vadd.f32 %v951, %v954
  %vm956 = vweird.f32 %v761
  %vm957 = vweird.f32 %v951
  %vm958 = vmor %vm956, %vm957
  %v959 = vsel %vm958, %v951, %v955
  %v960 = vand.u32 2147483647, %v761
  %vm961 = vcmp.eq.f32.partialorder %v960, 8.507059e+37
  %v962 = vand.u32 %v761, 2147483648
  %v963 = vor.u32 1.1754944e-38, %v962
  %v964 = vsel %vm961, %v963, %v959
  %v965 = vmul.f32 %v688, %v964
  %v966 = vrcp.pop %v764
  %v967 = vmul.f32 %v764, %v966
  %v968 = vsub.f32 1.0, %v967
  %v969 = vmul.f32 %v966, %v968
  %v970 = vadd.f32 %v966, %v969
  %vm971 = vweird.f32 %v764
  %vm972 = vweird.f32 %v966
  %vm973 = vmor %vm971, %vm972
  %v974 = vsel %vm973, %v966, %v970
  %v975 = vand.u32 2147483647, %v764
  %vm976 = vcmp.eq.f32.partialorder %v975, 8.507059e+37
  %v977 = vand.u32 %v764, 2147483648
  %v978 = vor.u32 1.1754944e-38, %v977
  %v979 = vsel %vm976, %v978, %v974
  %v980 = vmul.f32 %v690, %v979
  %v981 = vrcp.pop %v767
  %v982 = vmul.f32 %v767, %v981
  %v983 = vsub.f32 1.0, %v982
  %v984 = vmul.f32 %v981, %v983
  %v985 = vadd.f32 %v981, %v984
  %vm986 = vweird.f32 %v767
  %vm987 = vweird.f32 %v981
  %vm988 = vmor %vm986, %vm987
  %v989 = vsel %vm988, %v981, %v985
  %v990 = vand.u32 2147483647, %v767
  %vm991 = vcmp.eq.f32.partialorder %v990, 8.507059e+37
  %v992 = vand.u32 %v767, 2147483648
  %v993 = vor.u32 1.1754944e-38, %v992
  %v994 = vsel %vm991, %v993, %v989
  %v995 = vmul.f32 %v692, %v994
  %v996 = vrcp.pop %v770
  %v997 = vmul.f32 %v770, %v996
  %v998 = vsub.f32 1.0, %v997
  %v999 = vmul.f32 %v996, %v998
  %v1000 = vadd.f32 %v996, %v999
  %vm1001 = vweird.f32 %v770
  %vm1002 = vweird.f32 %v996
  %vm1003 = vmor %vm1001, %vm1002
  %v1004 = vsel %vm1003, %v996, %v1000
  %v1005 = vand.u32 2147483647, %v770
  %vm1006 = vcmp.eq.f32.partialorder %v1005, 8.507059e+37
  %v1007 = vand.u32 %v770, 2147483648
  %v1008 = vor.u32 1.1754944e-38, %v1007
  %v1009 = vsel %vm1006, %v1008, %v1004
  %v1010 = vmul.f32 %v694, %v1009
  %v1011 = vrcp.pop %v773
  %v1012 = vmul.f32 %v773, %v1011
  %v1013 = vsub.f32 1.0, %v1012
  %v1014 = vmul.f32 %v1011, %v1013
  %v1015 = vadd.f32 %v1011, %v1014
  %vm1016 = vweird.f32 %v773
  %vm1017 = vweird.f32 %v1011
  %vm1018 = vmor %vm1016, %vm1017
  %v1019 = vsel %vm1018, %v1011, %v1015
  %v1020 = vand.u32 2147483647, %v773
  %vm1021 = vcmp.eq.f32.partialorder %v1020, 8.507059e+37
  %v1022 = vand.u32 %v773, 2147483648
  %v1023 = vor.u32 1.1754944e-38, %v1022
  %v1024 = vsel %vm1021, %v1023, %v1019
  %v1025 = vmul.f32 %v696, %v1024
  %v1026 = vrcp.pop %v776
  %v1027 = vmul.f32 %v776, %v1026
  %v1028 = vsub.f32 1.0, %v1027
  %v1029 = vmul.f32 %v1026, %v1028
  %v1030 = vadd.f32 %v1026, %v1029
  %vm1031 = vweird.f32 %v776
  %vm1032 = vweird.f32 %v1026
  %vm1033 = vmor %vm1031, %vm1032
  %v1034 = vsel %vm1033, %v1026, %v1030
  %v1035 = vand.u32 2147483647, %v776
  %vm1036 = vcmp.eq.f32.partialorder %v1035, 8.507059e+37
  %v1037 = vand.u32 %v776, 2147483648
  %v1038 = vor.u32 1.1754944e-38, %v1037
  %v1039 = vsel %vm1036, %v1038, %v1034
  %v1040 = vmul.f32 %v698, %v1039
  %v1041 = vrcp.pop %v779
  %v1042 = vmul.f32 %v779, %v1041
  %v1043 = vsub.f32 1.0, %v1042
  %v1044 = vmul.f32 %v1041, %v1043
  %v1045 = vadd.f32 %v1041, %v1044
  %vm1046 = vweird.f32 %v779
  %vm1047 = vweird.f32 %v1041
  %vm1048 = vmor %vm1046, %vm1047
  %v1049 = vsel %vm1048, %v1041, %v1045
  %v1050 = vand.u32 2147483647, %v779
  %vm1051 = vcmp.eq.f32.partialorder %v1050, 8.507059e+37
  %v1052 = vand.u32 %v779, 2147483648
  %v1053 = vor.u32 1.1754944e-38, %v1052
  %v1054 = vsel %vm1051, %v1053, %v1049
  %v1055 = vmul.f32 %v700, %v1054
  %v1056 = vrcp.pop %v782
  %v1057 = vmul.f32 %v782, %v1056
  %v1058 = vsub.f32 1.0, %v1057
  %v1059 = vmul.f32 %v1056, %v1058
  %v1060 = vadd.f32 %v1056, %v1059
  %vm1061 = vweird.f32 %v782
  %vm1062 = vweird.f32 %v1056
  %vm1063 = vmor %vm1061, %vm1062
  %v1064 = vsel %vm1063, %v1056, %v1060
  %v1065 = vand.u32 2147483647, %v782
  %vm1066 = vcmp.eq.f32.partialorder %v1065, 8.507059e+37
  %v1067 = vand.u32 %v782, 2147483648
  %v1068 = vor.u32 1.1754944e-38, %v1067
  %v1069 = vsel %vm1066, %v1068, %v1064
  %v1070 = vmul.f32 %v702, %v1069
  %v1071 = vrcp.pop %v785
  %v1072 = vmul.f32 %v785, %v1071
  %v1073 = vsub.f32 1.0, %v1072
  %v1074 = vmul.f32 %v1071, %v1073
  %v1075 = vadd.f32 %v1071, %v1074
  %vm1076 = vweird.f32 %v785
  %vm1077 = vweird.f32 %v1071
  %vm1078 = vmor %vm1076, %vm1077
  %v1079 = vsel %vm1078, %v1071, %v1075
  %v1080 = vand.u32 2147483647, %v785
  %vm1081 = vcmp.eq.f32.partialorder %v1080, 8.507059e+37
  %v1082 = vand.u32 %v785, 2147483648
  %v1083 = vor.u32 1.1754944e-38, %v1082
  %v1084 = vsel %vm1081, %v1083, %v1079
  %v1085 = vmul.f32 %v704, %v1084
  %v1086 = vrcp.pop %v788
  %v1087 = vmul.f32 %v788, %v1086
  %v1088 = vsub.f32 1.0, %v1087
  %v1089 = vmul.f32 %v1086, %v1088
  %v1090 = vadd.f32 %v1086, %v1089
  %vm1091 = vweird.f32 %v788
  %vm1092 = vweird.f32 %v1086
  %vm1093 = vmor %vm1091, %vm1092
  %v1094 = vsel %vm1093, %v1086, %v1090
  %v1095 = vand.u32 2147483647, %v788
  %vm1096 = vcmp.eq.f32.partialorder %v1095, 8.507059e+37
  %v1097 = vand.u32 %v788, 2147483648
  %v1098 = vor.u32 1.1754944e-38, %v1097
  %v1099 = vsel %vm1096, %v1098, %v1094
  %v1100 = vmul.f32 %v706, %v1099
  %v1101 = vrcp.pop %v791
  %v1102 = vmul.f32 %v791, %v1101
  %v1103 = vsub.f32 1.0, %v1102
  %v1104 = vmul.f32 %v1101, %v1103
  %v1105 = vadd.f32 %v1101, %v1104
  %vm1106 = vweird.f32 %v791
  %vm1107 = vweird.f32 %v1101
  %vm1108 = vmor %vm1106, %vm1107
  %v1109 = vsel %vm1108, %v1101, %v1105
  %v1110 = vand.u32 2147483647, %v791
  %vm1111 = vcmp.eq.f32.partialorder %v1110, 8.507059e+37
  %v1112 = vand.u32 %v791, 2147483648
  %v1113 = vor.u32 1.1754944e-38, %v1112
  %v1114 = vsel %vm1111, %v1113, %v1109
  %v1115 = vmul.f32 %v708, %v1114
  %v1116 = vrcp.pop %v794
  %v1117 = vmul.f32 %v794, %v1116
  %v1118 = vsub.f32 1.0, %v1117
  %v1119 = vmul.f32 %v1116, %v1118
  %v1120 = vadd.f32 %v1116, %v1119
  %vm1121 = vweird.f32 %v794
  %vm1122 = vweird.f32 %v1116
  %vm1123 = vmor %vm1121, %vm1122
  %v1124 = vsel %vm1123, %v1116, %v1120
  %v1125 = vand.u32 2147483647, %v794
  %vm1126 = vcmp.eq.f32.partialorder %v1125, 8.507059e+37
  %v1127 = vand.u32 %v794, 2147483648
  %v1128 = vor.u32 1.1754944e-38, %v1127
  %v1129 = vsel %vm1126, %v1128, %v1124
  %v1130 = vmul.f32 %v710, %v1129
  %v1131 = vrcp.pop %v797
  %v1132 = vmul.f32 %v797, %v1131
  %v1133 = vsub.f32 1.0, %v1132
  %v1134 = vmul.f32 %v1131, %v1133
  %v1135 = vadd.f32 %v1131, %v1134
  %vm1136 = vweird.f32 %v797
  %vm1137 = vweird.f32 %v1131
  %vm1138 = vmor %vm1136, %vm1137
  %v1139 = vsel %vm1138, %v1131, %v1135
  %v1140 = vand.u32 2147483647, %v797
  %vm1141 = vcmp.eq.f32.partialorder %v1140, 8.507059e+37
  %v1142 = vand.u32 %v797, 2147483648
  %v1143 = vor.u32 1.1754944e-38, %v1142
  %v1144 = vsel %vm1141, %v1143, %v1139
  %v1145 = vmul.f32 %v712, %v1144
  %v1146 = vrcp.pop %v800
  %v1147 = vmul.f32 %v800, %v1146
  %v1148 = vsub.f32 1.0, %v1147
  %v1149 = vmul.f32 %v1146, %v1148
  %v1150 = vadd.f32 %v1146, %v1149
  %vm1151 = vweird.f32 %v800
  %vm1152 = vweird.f32 %v1146
  %vm1153 = vmor %vm1151, %vm1152
  %v1154 = vsel %vm1153, %v1146, %v1150
  %v1155 = vand.u32 2147483647, %v800
  %vm1156 = vcmp.eq.f32.partialorder %v1155, 8.507059e+37
  %v1157 = vand.u32 %v800, 2147483648
  %v1158 = vor.u32 1.1754944e-38, %v1157
  %v1159 = vsel %vm1156, %v1158, %v1154
  %v1160 = vmul.f32 %v714, %v1159
  %v1161 = vrcp.pop %v803
  %v1162 = vmul.f32 %v803, %v1161
  %v1163 = vsub.f32 1.0, %v1162
  %v1164 = vmul.f32 %v1161, %v1163
  %v1165 = vadd.f32 %v1161, %v1164
  %vm1166 = vweird.f32 %v803
  %vm1167 = vweird.f32 %v1161
  %vm1168 = vmor %vm1166, %vm1167
  %v1169 = vsel %vm1168, %v1161, %v1165
  %v1170 = vand.u32 2147483647, %v803
  %vm1171 = vcmp.eq.f32.partialorder %v1170, 8.507059e+37
  %v1172 = vand.u32 %v803, 2147483648
  %v1173 = vor.u32 1.1754944e-38, %v1172
  %v1174 = vsel %vm1171, %v1173, %v1169
  %v1175 = vmul.f32 %v716, %v1174
  %v1176 = vrcp.pop %v806
  %v1177 = vmul.f32 %v806, %v1176
  %v1178 = vsub.f32 1.0, %v1177
  %v1179 = vmul.f32 %v1176, %v1178
  %v1180 = vadd.f32 %v1176, %v1179
  %vm1181 = vweird.f32 %v806
  %vm1182 = vweird.f32 %v1176
  %vm1183 = vmor %vm1181, %vm1182
  %v1184 = vsel %vm1183, %v1176, %v1180
  %v1185 = vand.u32 2147483647, %v806
  %vm1186 = vcmp.eq.f32.partialorder %v1185, 8.507059e+37
  %v1187 = vand.u32 %v806, 2147483648
  %v1188 = vor.u32 1.1754944e-38, %v1187
  %v1189 = vsel %vm1186, %v1188, %v1184
  %v1190 = vmul.f32 %v718, %v1189
  %v1191 = vrcp.pop %v809
  %v1192 = vmul.f32 %v809, %v1191
  %v1193 = vsub.f32 1.0, %v1192
  %v1194 = vmul.f32 %v1191, %v1193
  %v1195 = vadd.f32 %v1191, %v1194
  %vm1196 = vweird.f32 %v809
  %vm1197 = vweird.f32 %v1191
  %vm1198 = vmor %vm1196, %vm1197
  %v1199 = vsel %vm1198, %v1191, %v1195
  %v1200 = vand.u32 2147483647, %v809
  %vm1201 = vcmp.eq.f32.partialorder %v1200, 8.507059e+37
  %v1202 = vand.u32 %v809, 2147483648
  %v1203 = vor.u32 1.1754944e-38, %v1202
  %v1204 = vsel %vm1201, %v1203, %v1199
  %v1205 = vmul.f32 %v720, %v1204
  %v1206 = vrcp.pop %v812
  %v1207 = vmul.f32 %v812, %v1206
  %v1208 = vsub.f32 1.0, %v1207
  %v1209 = vmul.f32 %v1206, %v1208
  %v1210 = vadd.f32 %v1206, %v1209
  %vm1211 = vweird.f32 %v812
  %vm1212 = vweird.f32 %v1206
  %vm1213 = vmor %vm1211, %vm1212
  %v1214 = vsel %vm1213, %v1206, %v1210
  %v1215 = vand.u32 2147483647, %v812
  %vm1216 = vcmp.eq.f32.partialorder %v1215, 8.507059e+37
  %v1217 = vand.u32 %v812, 2147483648
  %v1218 = vor.u32 1.1754944e-38, %v1217
  %v1219 = vsel %vm1216, %v1218, %v1214
  %v1220 = vmul.f32 %v722, %v1219
  %v1221 = vrcp.pop %v815
  %v1222 = vmul.f32 %v815, %v1221
  %v1223 = vsub.f32 1.0, %v1222
  %v1224 = vmul.f32 %v1221, %v1223
  %v1225 = vadd.f32 %v1221, %v1224
  %vm1226 = vweird.f32 %v815
  %vm1227 = vweird.f32 %v1221
  %vm1228 = vmor %vm1226, %vm1227
  %v1229 = vsel %vm1228, %v1221, %v1225
  %v1230 = vand.u32 2147483647, %v815
  %vm1231 = vcmp.eq.f32.partialorder %v1230, 8.507059e+37
  %v1232 = vand.u32 %v815, 2147483648
  %v1233 = vor.u32 1.1754944e-38, %v1232
  %v1234 = vsel %vm1231, %v1233, %v1229
  %v1235 = vmul.f32 %v724, %v1234
  %v1236 = vrcp.pop %v818
  %v1237 = vmul.f32 %v818, %v1236
  %v1238 = vsub.f32 1.0, %v1237
  %v1239 = vmul.f32 %v1236, %v1238
  %v1240 = vadd.f32 %v1236, %v1239
  %vm1241 = vweird.f32 %v818
  %vm1242 = vweird.f32 %v1236
  %vm1243 = vmor %vm1241, %vm1242
  %v1244 = vsel %vm1243, %v1236, %v1240
  %v1245 = vand.u32 2147483647, %v818
  %vm1246 = vcmp.eq.f32.partialorder %v1245, 8.507059e+37
  %v1247 = vand.u32 %v818, 2147483648
  %v1248 = vor.u32 1.1754944e-38, %v1247
  %v1249 = vsel %vm1246, %v1248, %v1244
  %v1250 = vmul.f32 %v726, %v1249
  %v1251 = vrcp.pop %v821
  %v1252 = vmul.f32 %v821, %v1251
  %v1253 = vsub.f32 1.0, %v1252
  %v1254 = vmul.f32 %v1251, %v1253
  %v1255 = vadd.f32 %v1251, %v1254
  %vm1256 = vweird.f32 %v821
  %vm1257 = vweird.f32 %v1251
  %vm1258 = vmor %vm1256, %vm1257
  %v1259 = vsel %vm1258, %v1251, %v1255
  %v1260 = vand.u32 2147483647, %v821
  %vm1261 = vcmp.eq.f32.partialorder %v1260, 8.507059e+37
  %v1262 = vand.u32 %v821, 2147483648
  %v1263 = vor.u32 1.1754944e-38, %v1262
  %v1264 = vsel %vm1261, %v1263, %v1259
  %v1265 = vmul.f32 %v728, %v1264
  %v1266 = vrcp.pop %v824
  %v1267 = vmul.f32 %v824, %v1266
  %v1268 = vsub.f32 1.0, %v1267
  %v1269 = vmul.f32 %v1266, %v1268
  %v1270 = vadd.f32 %v1266, %v1269
  %vm1271 = vweird.f32 %v824
  %vm1272 = vweird.f32 %v1266
  %vm1273 = vmor %vm1271, %vm1272
  %v1274 = vsel %vm1273, %v1266, %v1270
  %v1275 = vand.u32 2147483647, %v824
  %vm1276 = vcmp.eq.f32.partialorder %v1275, 8.507059e+37
  %v1277 = vand.u32 %v824, 2147483648
  %v1278 = vor.u32 1.1754944e-38, %v1277
  %v1279 = vsel %vm1276, %v1278, %v1274
  %v1280 = vmul.f32 %v730, %v1279
  %v1281 = vrcp.pop %v827
  %v1282 = vmul.f32 %v827, %v1281
  %v1283 = vsub.f32 1.0, %v1282
  %v1284 = vmul.f32 %v1281, %v1283
  %v1285 = vadd.f32 %v1281, %v1284
  %vm1286 = vweird.f32 %v827
  %vm1287 = vweird.f32 %v1281
  %vm1288 = vmor %vm1286, %vm1287
  %v1289 = vsel %vm1288, %v1281, %v1285
  %v1290 = vand.u32 2147483647, %v827
  %vm1291 = vcmp.eq.f32.partialorder %v1290, 8.507059e+37
  %v1292 = vand.u32 %v827, 2147483648
  %v1293 = vor.u32 1.1754944e-38, %v1292
  %v1294 = vsel %vm1291, %v1293, %v1289
  %v1295 = vmul.f32 %v732, %v1294
  %v1296 = vrcp.pop %v830
  %v1297 = vmul.f32 %v830, %v1296
  %v1298 = vsub.f32 1.0, %v1297
  %v1299 = vmul.f32 %v1296, %v1298
  %v1300 = vadd.f32 %v1296, %v1299
  %vm1301 = vweird.f32 %v830
  %vm1302 = vweird.f32 %v1296
  %vm1303 = vmor %vm1301, %vm1302
  %v1304 = vsel %vm1303, %v1296, %v1300
  %v1305 = vand.u32 2147483647, %v830
  %vm1306 = vcmp.eq.f32.partialorder %v1305, 8.507059e+37
  %v1307 = vand.u32 %v830, 2147483648
  %v1308 = vor.u32 1.1754944e-38, %v1307
  %v1309 = vsel %vm1306, %v1308, %v1304
  %v1310 = vmul.f32 %v734, %v1309
  %v1311 = vld [vmem:[%s2] sm:$0xff]
  %v1312 = vld [vmem:[%s2 + $0x8] sm:$0xff]
  %v1313 = vld [vmem:[%s2 + $0x10] sm:$0xff]
  %v1314 = vld [vmem:[%s2 + $0x18] sm:$0xff]
  %v1315 = vld [vmem:[%s2 + $0x20] sm:$0xff]
  %v1316 = vld [vmem:[%s2 + $0x28] sm:$0xff]
  %v1317 = vld [vmem:[%s2 + $0x30] sm:$0xff]
  %v1318 = vld [vmem:[%s2 + $0x38] sm:$0xff]
  %v1319 = vld [vmem:[%s2 + $0x40] sm:$0xff]
  %v1320 = vld [vmem:[%s2 + $0x48] sm:$0xff]
  %v1321 = vld [vmem:[%s2 + $0x50] sm:$0xff]
  %v1322 = vld [vmem:[%s2 + $0x58] sm:$0xff]
  %v1323 = vld [vmem:[%s2 + $0x60] sm:$0xff]
  %v1324 = vld [vmem:[%s2 + $0x68] sm:$0xff]
  %v1325 = vld [vmem:[%s2 + $0x70] sm:$0xff]
  %v1326 = vld [vmem:[%s2 + $0x78] sm:$0xff]
  %v1327 = vld [vmem:[%s2 + $0x80] sm:$0xff]
  %v1328 = vld [vmem:[%s2 + $0x88] sm:$0xff]
  %v1329 = vld [vmem:[%s2 + $0x90] sm:$0xff]
  %v1330 = vld [vmem:[%s2 + $0x98] sm:$0xff]
  %v1331 = vld [vmem:[%s2 + $0xa0] sm:$0xff]
  %v1332 = vld [vmem:[%s2 + $0xa8] sm:$0xff]
  %v1333 = vld [vmem:[%s2 + $0xb0] sm:$0xff]
  %v1334 = vld [vmem:[%s2 + $0xb8] sm:$0xff]
  %v1335 = vld [vmem:[%s2 + $0xc0] sm:$0xff]
  %v1336 = vld [vmem:[%s2 + $0xc8] sm:$0xff]
  %v1337 = vld [vmem:[%s2 + $0xd0] sm:$0xff]
  %v1338 = vld [vmem:[%s2 + $0xd8] sm:$0xff]
  %v1339 = vld [vmem:[%s2 + $0xe0] sm:$0xff]
  %v1340 = vld [vmem:[%s2 + $0xe8] sm:$0xff]
  %v1341 = vld [vmem:[%s2 + $0xf0] sm:$0xff]
  %v1342 = vld [vmem:[%s2 + $0xf8] sm:$0xff]
  %v1344 = vsel %vm542, %v845, 0
  %v1347 = vsel %vm542, %v860, 0
  %v1350 = vsel %vm542, %v875, 0
  %v1353 = vsel %vm542, %v890, 0
  %1355 = vmatpush.msra.mxu0 0.0
  %1356 = vmatpush.msra.mxu0 0.0
  %1357 = vmatpush.msra.mxu0 0.0
  %1358 = vmatpush.msra.mxu0 0.0
  %1359 = vmatpush.msra.mxu0 0.0
  %1360 = vmatpush.msra.mxu0 0.0
  %1361 = vmatpush.msra.mxu0 0.0
  %1362 = vmatpush.msra.mxu0 0.0
  %1363 = vmatpush.msra.mxu0 0.0
  %1364 = vmatpush.msra.mxu0 0.0
  %1365 = vmatpush.msra.mxu0 0.0
  %1366 = vmatpush.msra.mxu0 0.0
  %1367 = vmatpush.msra.mxu0 %v1314
  %1368 = vmatpush.msra.mxu0 %v1313
  %1369 = vmatpush.msra.mxu0 %v1312
  %1370 = vmatpush.msra.mxu0 %v1311
  %1371 = vmatmul.f32.gmra.mxu0 %v1344
  %v1372 = vpop.f32.mrf.mxu0
  %v1373 = vadd.f32 0.0, %v1372
  %1374 = vmatmul.f32.gmra.mxu0 %v1347
  %v1375 = vpop.f32.mrf.mxu0
  %v1376 = vadd.f32 0.0, %v1375
  %1377 = vmatmul.f32.gmra.mxu0 %v1350
  %v1378 = vpop.f32.mrf.mxu0
  %v1379 = vadd.f32 0.0, %v1378
  %1380 = vmatmul.f32.gmra.mxu0 %v1353
  %v1381 = vpop.f32.mrf.mxu0
  %v1382 = vadd.f32 0.0, %v1381
  %1383 = vdwg.mxu0
  %v1385 = vsel %vm542, %v905, 0
  %v1388 = vsel %vm542, %v920, 0
  %v1391 = vsel %vm542, %v935, 0
  %v1394 = vsel %vm542, %v950, 0
  %1396 = vmatpush.msra.mxu0 0.0
  %1397 = vmatpush.msra.mxu0 0.0
  %1398 = vmatpush.msra.mxu0 0.0
  %1399 = vmatpush.msra.mxu0 0.0
  %1400 = vmatpush.msra.mxu0 0.0
  %1401 = vmatpush.msra.mxu0 0.0
  %1402 = vmatpush.msra.mxu0 0.0
  %1403 = vmatpush.msra.mxu0 0.0
  %1404 = vmatpush.msra.mxu0 0.0
  %1405 = vmatpush.msra.mxu0 0.0
  %1406 = vmatpush.msra.mxu0 0.0
  %1407 = vmatpush.msra.mxu0 0.0
  %1408 = vmatpush.msra.mxu0 %v1318
  %1409 = vmatpush.msra.mxu0 %v1317
  %1410 = vmatpush.msra.mxu0 %v1316
  %1411 = vmatpush.msra.mxu0 %v1315
  %1412 = vmatmul.f32.gmra.mxu0 %v1385
  %v1413 = vpop.f32.mrf.mxu0
  %v1414 = vadd.f32 0.0, %v1413
  %1415 = vmatmul.f32.gmra.mxu0 %v1388
  %v1416 = vpop.f32.mrf.mxu0
  %v1417 = vadd.f32 0.0, %v1416
  %1418 = vmatmul.f32.gmra.mxu0 %v1391
  %v1419 = vpop.f32.mrf.mxu0
  %v1420 = vadd.f32 0.0, %v1419
  %1421 = vmatmul.f32.gmra.mxu0 %v1394
  %v1422 = vpop.f32.mrf.mxu0
  %v1423 = vadd.f32 0.0, %v1422
  %1424 = vdwg.mxu0
  %v1426 = vsel %vm542, %v965, 0
  %v1429 = vsel %vm542, %v980, 0
  %v1432 = vsel %vm542, %v995, 0
  %v1435 = vsel %vm542, %v1010, 0
  %1437 = vmatpush.msra.mxu0 0.0
  %1438 = vmatpush.msra.mxu0 0.0
  %1439 = vmatpush.msra.mxu0 0.0
  %1440 = vmatpush.msra.mxu0 0.0
  %1441 = vmatpush.msra.mxu0 0.0
  %1442 = vmatpush.msra.mxu0 0.0
  %1443 = vmatpush.msra.mxu0 0.0
  %1444 = vmatpush.msra.mxu0 0.0
  %1445 = vmatpush.msra.mxu0 0.0
  %1446 = vmatpush.msra.mxu0 0.0
  %1447 = vmatpush.msra.mxu0 0.0
  %1448 = vmatpush.msra.mxu0 0.0
  %1449 = vmatpush.msra.mxu0 %v1322
  %1450 = vmatpush.msra.mxu0 %v1321
  %1451 = vmatpush.msra.mxu0 %v1320
  %1452 = vmatpush.msra.mxu0 %v1319
  %1453 = vmatmul.f32.gmra.mxu0 %v1426
  %v1454 = vpop.f32.mrf.mxu0
  %v1455 = vadd.f32 0.0, %v1454
  %1456 = vmatmul.f32.gmra.mxu0 %v1429
  %v1457 = vpop.f32.mrf.mxu0
  %v1458 = vadd.f32 0.0, %v1457
  %1459 = vmatmul.f32.gmra.mxu0 %v1432
  %v1460 = vpop.f32.mrf.mxu0
  %v1461 = vadd.f32 0.0, %v1460
  %1462 = vmatmul.f32.gmra.mxu0 %v1435
  %v1463 = vpop.f32.mrf.mxu0
  %v1464 = vadd.f32 0.0, %v1463
  %1465 = vdwg.mxu0
  %v1467 = vsel %vm542, %v1025, 0
  %v1470 = vsel %vm542, %v1040, 0
  %v1473 = vsel %vm542, %v1055, 0
  %v1476 = vsel %vm542, %v1070, 0
  %1478 = vmatpush.msra.mxu0 0.0
  %1479 = vmatpush.msra.mxu0 0.0
  %1480 = vmatpush.msra.mxu0 0.0
  %1481 = vmatpush.msra.mxu0 0.0
  %1482 = vmatpush.msra.mxu0 0.0
  %1483 = vmatpush.msra.mxu0 0.0
  %1484 = vmatpush.msra.mxu0 0.0
  %1485 = vmatpush.msra.mxu0 0.0
  %1486 = vmatpush.msra.mxu0 0.0
  %1487 = vmatpush.msra.mxu0 0.0
  %1488 = vmatpush.msra.mxu0 0.0
  %1489 = vmatpush.msra.mxu0 0.0
  %1490 = vmatpush.msra.mxu0 %v1326
  %1491 = vmatpush.msra.mxu0 %v1325
  %1492 = vmatpush.msra.mxu0 %v1324
  %1493 = vmatpush.msra.mxu0 %v1323
  %1494 = vmatmul.f32.gmra.mxu0 %v1467
  %v1495 = vpop.f32.mrf.mxu0
  %v1496 = vadd.f32 0.0, %v1495
  %1497 = vmatmul.f32.gmra.mxu0 %v1470
  %v1498 = vpop.f32.mrf.mxu0
  %v1499 = vadd.f32 0.0, %v1498
  %1500 = vmatmul.f32.gmra.mxu0 %v1473
  %v1501 = vpop.f32.mrf.mxu0
  %v1502 = vadd.f32 0.0, %v1501
  %1503 = vmatmul.f32.gmra.mxu0 %v1476
  %v1504 = vpop.f32.mrf.mxu0
  %v1505 = vadd.f32 0.0, %v1504
  %1506 = vdwg.mxu0
  %v1508 = vsel %vm542, %v1085, 0
  %v1511 = vsel %vm542, %v1100, 0
  %v1514 = vsel %vm542, %v1115, 0
  %v1517 = vsel %vm542, %v1130, 0
  %1519 = vmatpush.msra.mxu0 0.0
  %1520 = vmatpush.msra.mxu0 0.0
  %1521 = vmatpush.msra.mxu0 0.0
  %1522 = vmatpush.msra.mxu0 0.0
  %1523 = vmatpush.msra.mxu0 0.0
  %1524 = vmatpush.msra.mxu0 0.0
  %1525 = vmatpush.msra.mxu0 0.0
  %1526 = vmatpush.msra.mxu0 0.0
  %1527 = vmatpush.msra.mxu0 0.0
  %1528 = vmatpush.msra.mxu0 0.0
  %1529 = vmatpush.msra.mxu0 0.0
  %1530 = vmatpush.msra.mxu0 0.0
  %1531 = vmatpush.msra.mxu0 %v1330
  %1532 = vmatpush.msra.mxu0 %v1329
  %1533 = vmatpush.msra.mxu0 %v1328
  %1534 = vmatpush.msra.mxu0 %v1327
  %1535 = vmatmul.f32.gmra.mxu0 %v1508
  %v1536 = vpop.f32.mrf.mxu0
  %v1537 = vadd.f32 0.0, %v1536
  %1538 = vmatmul.f32.gmra.mxu0 %v1511
  %v1539 = vpop.f32.mrf.mxu0
  %v1540 = vadd.f32 0.0, %v1539
  %1541 = vmatmul.f32.gmra.mxu0 %v1514
  %v1542 = vpop.f32.mrf.mxu0
  %v1543 = vadd.f32 0.0, %v1542
  %1544 = vmatmul.f32.gmra.mxu0 %v1517
  %v1545 = vpop.f32.mrf.mxu0
  %v1546 = vadd.f32 0.0, %v1545
  %1547 = vdwg.mxu0
  %v1549 = vsel %vm542, %v1145, 0
  %v1552 = vsel %vm542, %v1160, 0
  %v1555 = vsel %vm542, %v1175, 0
  %v1558 = vsel %vm542, %v1190, 0
  %1560 = vmatpush.msra.mxu0 0.0
  %1561 = vmatpush.msra.mxu0 0.0
  %1562 = vmatpush.msra.mxu0 0.0
  %1563 = vmatpush.msra.mxu0 0.0
  %1564 = vmatpush.msra.mxu0 0.0
  %1565 = vmatpush.msra.mxu0 0.0
  %1566 = vmatpush.msra.mxu0 0.0
  %1567 = vmatpush.msra.mxu0 0.0
  %1568 = vmatpush.msra.mxu0 0.0
  %1569 = vmatpush.msra.mxu0 0.0
  %1570 = vmatpush.msra.mxu0 0.0
  %1571 = vmatpush.msra.mxu0 0.0
  %1572 = vmatpush.msra.mxu0 %v1334
  %1573 = vmatpush.msra.mxu0 %v1333
  %1574 = vmatpush.msra.mxu0 %v1332
  %1575 = vmatpush.msra.mxu0 %v1331
  %1576 = vmatmul.f32.gmra.mxu0 %v1549
  %v1577 = vpop.f32.mrf.mxu0
  %v1578 = vadd.f32 0.0, %v1577
  %1579 = vmatmul.f32.gmra.mxu0 %v1552
  %v1580 = vpop.f32.mrf.mxu0
  %v1581 = vadd.f32 0.0, %v1580
  %1582 = vmatmul.f32.gmra.mxu0 %v1555
  %v1583 = vpop.f32.mrf.mxu0
  %v1584 = vadd.f32 0.0, %v1583
  %1585 = vmatmul.f32.gmra.mxu0 %v1558
  %v1586 = vpop.f32.mrf.mxu0
  %v1587 = vadd.f32 0.0, %v1586
  %1588 = vdwg.mxu0
  %v1590 = vsel %vm542, %v1205, 0
  %v1593 = vsel %vm542, %v1220, 0
  %v1596 = vsel %vm542, %v1235, 0
  %v1599 = vsel %vm542, %v1250, 0
  %1601 = vmatpush.msra.mxu0 0.0
  %1602 = vmatpush.msra.mxu0 0.0
  %1603 = vmatpush.msra.mxu0 0.0
  %1604 = vmatpush.msra.mxu0 0.0
  %1605 = vmatpush.msra.mxu0 0.0
  %1606 = vmatpush.msra.mxu0 0.0
  %1607 = vmatpush.msra.mxu0 0.0
  %1608 = vmatpush.msra.mxu0 0.0
  %1609 = vmatpush.msra.mxu0 0.0
  %1610 = vmatpush.msra.mxu0 0.0
  %1611 = vmatpush.msra.mxu0 0.0
  %1612 = vmatpush.msra.mxu0 0.0
  %1613 = vmatpush.msra.mxu0 %v1338
  %1614 = vmatpush.msra.mxu0 %v1337
  %1615 = vmatpush.msra.mxu0 %v1336
  %1616 = vmatpush.msra.mxu0 %v1335
  %1617 = vmatmul.f32.gmra.mxu0 %v1590
  %v1618 = vpop.f32.mrf.mxu0
  %v1619 = vadd.f32 0.0, %v1618
  %1620 = vmatmul.f32.gmra.mxu0 %v1593
  %v1621 = vpop.f32.mrf.mxu0
  %v1622 = vadd.f32 0.0, %v1621
  %1623 = vmatmul.f32.gmra.mxu0 %v1596
  %v1624 = vpop.f32.mrf.mxu0
  %v1625 = vadd.f32 0.0, %v1624
  %1626 = vmatmul.f32.gmra.mxu0 %v1599
  %v1627 = vpop.f32.mrf.mxu0
  %v1628 = vadd.f32 0.0, %v1627
  %1629 = vdwg.mxu0
  %v1631 = vsel %vm542, %v1265, 0
  %v1634 = vsel %vm542, %v1280, 0
  %v1637 = vsel %vm542, %v1295, 0
  %v1640 = vsel %vm542, %v1310, 0
  %1642 = vmatpush.msra.mxu0 0.0
  %1643 = vmatpush.msra.mxu0 0.0
  %1644 = vmatpush.msra.mxu0 0.0
  %1645 = vmatpush.msra.mxu0 0.0
  %1646 = vmatpush.msra.mxu0 0.0
  %1647 = vmatpush.msra.mxu0 0.0
  %1648 = vmatpush.msra.mxu0 0.0
  %1649 = vmatpush.msra.mxu0 0.0
  %1650 = vmatpush.msra.mxu0 0.0
  %1651 = vmatpush.msra.mxu0 0.0
  %1652 = vmatpush.msra.mxu0 0.0
  %1653 = vmatpush.msra.mxu0 0.0
  %1654 = vmatpush.msra.mxu0 %v1342
  %1655 = vmatpush.msra.mxu0 %v1341
  %1656 = vmatpush.msra.mxu0 %v1340
  %1657 = vmatpush.msra.mxu0 %v1339
  %1658 = vmatmul.f32.gmra.mxu0 %v1631
  %v1659 = vpop.f32.mrf.mxu0
  %v1660 = vadd.f32 0.0, %v1659
  %1661 = vmatmul.f32.gmra.mxu0 %v1634
  %v1662 = vpop.f32.mrf.mxu0
  %v1663 = vadd.f32 0.0, %v1662
  %1664 = vmatmul.f32.gmra.mxu0 %v1637
  %v1665 = vpop.f32.mrf.mxu0
  %v1666 = vadd.f32 0.0, %v1665
  %1667 = vmatmul.f32.gmra.mxu0 %v1640
  %v1668 = vpop.f32.mrf.mxu0
  %v1669 = vadd.f32 0.0, %v1668
  %1670 = vdwg.mxu0
  %1671 = vst.msk [vmem:[%s4] sm:$0xff] %vm117, %v1373
  %1672 = vst.msk [vmem:[%s4 + $0x8] sm:$0xff] %vm117, %v1376
  %1673 = vst.msk [vmem:[%s4 + $0x10] sm:$0xff] %vm117, %v1379
  %1674 = vst.msk [vmem:[%s4 + $0x18] sm:$0xff] %vm117, %v1382
  %1675 = vst.msk [vmem:[%s4 + $0x20] sm:$0xff] %vm117, %v1414
  %1676 = vst.msk [vmem:[%s4 + $0x28] sm:$0xff] %vm117, %v1417
  %1677 = vst.msk [vmem:[%s4 + $0x30] sm:$0xff] %vm117, %v1420
  %1678 = vst.msk [vmem:[%s4 + $0x38] sm:$0xff] %vm117, %v1423
  %1679 = vst.msk [vmem:[%s4 + $0x40] sm:$0xff] %vm117, %v1455
  %1680 = vst.msk [vmem:[%s4 + $0x48] sm:$0xff] %vm117, %v1458
  %1681 = vst.msk [vmem:[%s4 + $0x50] sm:$0xff] %vm117, %v1461
  %1682 = vst.msk [vmem:[%s4 + $0x58] sm:$0xff] %vm117, %v1464
  %1683 = vst.msk [vmem:[%s4 + $0x60] sm:$0xff] %vm117, %v1496
  %1684 = vst.msk [vmem:[%s4 + $0x68] sm:$0xff] %vm117, %v1499
  %1685 = vst.msk [vmem:[%s4 + $0x70] sm:$0xff] %vm117, %v1502
  %1686 = vst.msk [vmem:[%s4 + $0x78] sm:$0xff] %vm117, %v1505
  %1687 = vst.msk [vmem:[%s4 + $0x80] sm:$0xff] %vm117, %v1537
  %1688 = vst.msk [vmem:[%s4 + $0x88] sm:$0xff] %vm117, %v1540
  %1689 = vst.msk [vmem:[%s4 + $0x90] sm:$0xff] %vm117, %v1543
  %1690 = vst.msk [vmem:[%s4 + $0x98] sm:$0xff] %vm117, %v1546
  %1691 = vst.msk [vmem:[%s4 + $0xa0] sm:$0xff] %vm117, %v1578
  %1692 = vst.msk [vmem:[%s4 + $0xa8] sm:$0xff] %vm117, %v1581
  %1693 = vst.msk [vmem:[%s4 + $0xb0] sm:$0xff] %vm117, %v1584
  %1694 = vst.msk [vmem:[%s4 + $0xb8] sm:$0xff] %vm117, %v1587
  %1695 = vst.msk [vmem:[%s4 + $0xc0] sm:$0xff] %vm117, %v1619
  %1696 = vst.msk [vmem:[%s4 + $0xc8] sm:$0xff] %vm117, %v1622
  %1697 = vst.msk [vmem:[%s4 + $0xd0] sm:$0xff] %vm117, %v1625
  %1698 = vst.msk [vmem:[%s4 + $0xd8] sm:$0xff] %vm117, %v1628
  %1699 = vst.msk [vmem:[%s4 + $0xe0] sm:$0xff] %vm117, %v1660
  %1700 = vst.msk [vmem:[%s4 + $0xe8] sm:$0xff] %vm117, %v1663
  %1701 = vst.msk [vmem:[%s4 + $0xf0] sm:$0xff] %vm117, %v1666
  %1702 = vst.msk [vmem:[%s4 + $0xf8] sm:$0xff] %vm117, %v1669
  // Predicated region
  $region18: #{sparse_attention.1} parent=0 // pred_check
    _
  $region19: #{sparse_attention.1} parent=0 // pred_check_branch
    %1704 = sbr.rel (0) target = $region21
  $region20: #{sparse_attention.1} parent=0 // pred_region
    _
  $region21: #{sparse_attention.1} parent=0 // pred_fallthru
    _
  // Predicated region
  $region22: #{sparse_attention.1} parent=0 // pred_check
    _
  $region23: #{sparse_attention.1} parent=0 // pred_check_branch
    %1706 = sbr.rel (0) target = $region25
  $region24: #{sparse_attention.1} parent=0 // pred_region
    _
  $region25: #{sparse_attention.1} parent=0 // pred_fallthru
    _

</llo_original>
